<compile_context>
chip_gen: v5e
topology: v5e:2x2
jax: 0.10.0
libtpu: 0.0.40
codegen_flags: <defaults>
</compile_context>

<pallas_src>
import functools

import jax
import jax.numpy as jnp
from jax import lax
from jax.experimental import pallas as pl
from jax.experimental.pallas import tpu as pltpu

_BIG = 3.0e38  # Python float -> becomes an in-trace literal, never a captured jax.Array


def _round_up(v, m):
    return (v + m - 1) // m * m


def _rips0_kernel(a_ref, b_ref, deaths_ref, d2_ref, row_ref, *, n, n_pad, n_chunk, unroll):
    """Prim's MST on squared euclidean distances.

    a_ref/b_ref : (n_pad, d+2) f32 augmented, zero-padded point features.
    deaths_ref  : (rows_out, 128) f32 output; row s holds (broadcast across lanes)
                  the SQUARED death time of the s-th MST edge, s = 0..n-2.
    d2_ref      : (n_pad, n_pad) f32 VMEM scratch, squared-distance matrix
                  (padded COLUMNS hold the _BIG sentinel; padded rows unused).
    row_ref     : (n_chunk, 128) f32 VMEM bounce buffer for the packed row gather.
    """
    # ---- setup: blocked pairwise squared distances, single store per chunk ----
    # NOTE: Gram-trick distances lose precision for near-duplicate points
    # (catastrophic cancellation); clamped at 0 below.
    a_all = a_ref[...]                                              # (n_pad, d+2)
    for c in range(n_chunk):                                        # static, small
        bc = b_ref[c * 128:(c + 1) * 128, :]                        # (128, d+2)
        blk = lax.dot_general(a_all, bc, (((1,), (1,)), ((), ())),
                              preferred_element_type=jnp.float32)   # (n_pad, 128)
        col = c * 128 + lax.broadcasted_iota(jnp.int32, (1, 128), 1)
        blk = jnp.where(col >= n, _BIG, jnp.maximum(blk, 0.0))      # fuse pad sentinel
        d2_ref[:, c * 128:(c + 1) * 128] = blk                      # one full-width store
        row_ref[c:c + 1, :] = blk[0:1, :]                           # packed row 0 -> mind0

    # Packed flat vertex index: vertex j lives at (sub = j // 128, lane = j % 128).
    sub = lax.broadcasted_iota(jnp.int32, (n_chunk, 128), 0)
    lane = lax.broadcasted_iota(jnp.int32, (n_chunk, 128), 1)
    flat = sub * 128 + lane

    # Vertex 0 starts in the tree; padded vertices (>= n) already hold _BIG and
    # are therefore permanently "visited" (mind == _BIG marks visited).
    mind0 = jnp.where(flat == 0, _BIG, row_ref[...])                # (n_chunk, 128)

    deaths_ref[...] = jnp.zeros(deaths_ref.shape, jnp.float32)

    def body(step, mind):
        # Next death = global min over unvisited vertices; visited/padded lanes
        # hold exactly _BIG, which can never equal min_val while an unvisited
        # vertex remains (step < n-1 guarantees a finite candidate).
        min_val = jnp.min(mind, keepdims=True)                      # (1, 1)
        is_min = mind == min_val
        idx_arr = jnp.min(jnp.where(is_min, flat, n_pad), keepdims=True)  # (1,1) i32
        # Record this step's (squared) death: lane-dense row store.
        deaths_ref[pl.ds(step, 1), :] = jnp.broadcast_to(min_val, (1, 128))
        # Gather the new vertex's packed distance row (dynamic sublane offset,
        # static 128-lane-aligned column chunks) via the tiny bounce buffer.
        idx = idx_arr[0, 0]
        for c in range(n_chunk):
            row_ref[c:c + 1, :] = d2_ref[pl.ds(idx, 1), c * 128:(c + 1) * 128]
        row = row_ref[...]                                          # (n_chunk, 128)
        onehot = flat == idx_arr
        # Already-visited lanes (== _BIG) stay _BIG; the new vertex is marked
        # visited; everyone else relaxes against the new row.
        mind = jnp.where((mind == _BIG) | onehot, _BIG, jnp.minimum(mind, row))
        return mind

    lax.fori_loop(0, n - 1, body, mind0, unroll=unroll)


def rips0_diagram(x, metric="euclidean"):
    """Pallas equivalent of Rips0Diagram.apply(x, metric) for dim-0 bars."""
    if metric != "euclidean":
        raise NotImplementedError("only euclidean metric implemented")
    x = jnp.asarray(x, jnp.float32)
    n, d = x.shape

    n_pad = _round_up(max(n, 128), 128)      # lane-padded vertex count
    n_chunk = n_pad // 128
    rows_out = _round_up(max(n, 8), 8)       # sublane-padded output rows
    unroll = True if n <= 64 else 8          # packed state -> unroll 8 is spill-free

    # Augmented features: a[i]·b[j] = |x_i|^2 + |x_j|^2 - 2 x_i·x_j = d2(i, j).
    sq = jnp.sum(x * x, axis=1, keepdims=True)
    one = jnp.ones((n, 1), jnp.float32)
    a = jnp.pad(jnp.concatenate([x, sq, one], axis=1), ((0, n_pad - n), (0, 0)))
    b = jnp.pad(jnp.concatenate([-2.0 * x, one, sq], axis=1), ((0, n_pad - n), (0, 0)))
    daug = d + 2

    # Chip-aware scoped-VMEM limit (v7x: 64 MiB physical; v5e/v6e: 128 MiB).
    try:
        cap = int(pltpu.get_tpu_info().vmem_capacity_bytes)
    except Exception:
        cap = 64 << 20                        # conservative fallback (v7x)
    d2_bytes = n_pad * n_pad * 4
    io_bytes = 2 * (2 * n_pad * daug + rows_out * 128) * 4
    tmp_bytes = 8 * n_pad * 128 * 4           # per-chunk matmul temporaries
    need = d2_bytes + io_bytes + tmp_bytes + (4 << 20)
    vmem_limit = int(min(int(0.9 * cap), max(32 << 20, need)))

    kernel = functools.partial(_rips0_kernel, n=n, n_pad=n_pad,
                               n_chunk=n_chunk, unroll=unroll)
    deaths_sq = pl.pallas_call(
        kernel,
        out_shape=jax.ShapeDtypeStruct((rows_out, 128), jnp.float32),
        grid=(1,),
        in_specs=[pl.BlockSpec((n_pad, daug), lambda i: (0, 0)),
                  pl.BlockSpec((n_pad, daug), lambda i: (0, 0))],
        out_specs=pl.BlockSpec((rows_out, 128), lambda i: (0, 0)),
        scratch_shapes=[pltpu.VMEM((n_pad, n_pad), jnp.float32),
                        pltpu.VMEM((n_chunk, 128), jnp.float32)],
        compiler_params=pltpu.CompilerParams(
            dimension_semantics=("arbitrary",),
            vmem_limit_bytes=vmem_limit,
        ),
    )(a, b)

    # sqrt deferred to the final (n-1) values; Prim's order is unchanged by sqrt.
    deaths = jnp.sqrt(jnp.maximum(deaths_sq[: n - 1, 0], 0.0))
    deaths = jnp.sort(deaths)                      # diagram emitted in ascending death order
    births = jnp.zeros_like(deaths)
    dgm = jnp.stack([births, deaths], axis=1)      # (n-1, 2) finite dim-0 bars
    # TODO(synk): the single essential bar (0, +inf) of the surviving component is omitted.
    return dgm


class Rips0Layer:
    """Mirror of torch_tda.nn.Rips0Layer: dim-0 Rips persistence via union-find/MST."""

    def __init__(self, metric="euclidean"):
        self.metric = metric

    def __call__(self, x):
        return rips0_diagram(x, self.metric)


def _reference_dgm(x):
    """Pure-JAX Prim reference (exact pairwise distances) for validation."""
    x = jnp.asarray(x, jnp.float32)
    n = x.shape[0]
    diff = x[:, None, :] - x[None, :, :]
    dist = jnp.sqrt(jnp.maximum(jnp.sum(diff * diff, axis=-1), 0.0))
    inf = jnp.float32(3.0e38)
    visited = jnp.arange(n) == 0
    mind = jnp.where(visited, inf, dist[0])
    deaths = jnp.zeros((n - 1,), jnp.float32)

    def body(step, carry):
        mind, visited, deaths = carry
        j = jnp.argmin(mind)
        deaths = deaths.at[step].set(mind[j])
        visited = visited.at[j].set(True)
        mind = jnp.where(visited, inf, jnp.minimum(mind, dist[j]))
        return mind, visited, deaths

    _, _, deaths = lax.fori_loop(0, n - 1, body, (mind, visited, deaths))
    deaths = jnp.sort(deaths)
    return jnp.stack([jnp.zeros_like(deaths), deaths], axis=1)


if __name__ == "__main__":
    key = jax.random.PRNGKey(0)
    N, D = 16, 8                                   # 16 points in R^8
    x = jax.random.normal(key, (N, D), dtype=jnp.float32)

    layer = Rips0Layer(metric="euclidean")
    dgm = jax.block_until_ready(layer(x))          # (N-1, 2)

    ref = jax.block_until_ready(_reference_dgm(x))
    assert dgm.shape == (N - 1, 2)
    assert bool(jnp.all(jnp.isfinite(dgm)))
    # Loose-ish tolerance: kernel uses the MXU Gram trick, reference uses exact
    # pairwise differences; death times here are O(1).
    assert bool(jnp.allclose(dgm, ref, atol=1e-2, rtol=1e-2))

    print("KERNEL_OK")
</pallas_src>

<mosaic_0001>
module attributes {stable_mosaic.version = 11 : i64} {
  func.func @_rips0_kernel(%arg0: i32, %arg1: memref<128x10xf32, #tpu.memory_space<vmem>>, %arg2: memref<128x10xf32, #tpu.memory_space<vmem>>, %arg3: memref<16x128xf32, #tpu.memory_space<vmem>>, %arg4: memref<128x128xf32, #tpu.memory_space<vmem>>, %arg5: memref<1x128xf32, #tpu.memory_space<vmem>>) attributes {dimension_semantics = [#tpu.dimension_semantics<arbitrary>], iteration_bounds = array<i64: 1>, scalar_prefetch = 0 : i64, scratch_operands = 2 : i64, tpu.core_type = #tpu.core_type<tc>, window_params = [{pipeline_mode = #tpu.pipeline_mode<synchronous>, transform_indices = @transform_0, window_bounds = array<i64: 128, 10>}, {pipeline_mode = #tpu.pipeline_mode<synchronous>, transform_indices = @transform_1, window_bounds = array<i64: 128, 10>}, {pipeline_mode = #tpu.pipeline_mode<synchronous>, transform_indices = @transform_2, window_bounds = array<i64: 16, 128>}]} {
    %c0 = arith.constant 0 : index
    %c0_0 = arith.constant 0 : index
    %0 = vector.load %arg1[%c0, %c0_0] : memref<128x10xf32, #tpu.memory_space<vmem>>, vector<128x10xf32>
    %c0_1 = arith.constant 0 : index
    %c0_2 = arith.constant 0 : index
    %1 = vector.load %arg2[%c0_1, %c0_2] : memref<128x10xf32, #tpu.memory_space<vmem>>, vector<128x10xf32>
    %cst = arith.constant dense<0.000000e+00> : vector<128x128xf32>
    %2 = tpu.matmul %0, %1, %cst {dimension_numbers = #tpu.dot_dimension_numbers<[1], [1], [0], [0], [0, 0, 1, 0], [], []>} : vector<128x10xf32>, vector<128x10xf32>, vector<128x128xf32> -> vector<128x128xf32>
    %3 = tpu.iota {dimensions = array<i32: 1>} : vector<1x128xi32>
    %c0_i32 = arith.constant 0 : i32
    %4 = vector.broadcast %c0_i32 : i32 to vector<1x128xi32>
    %5 = arith.addi %4, %3 : vector<1x128xi32>
    %c16_i32 = arith.constant 16 : i32
    %6 = vector.broadcast %c16_i32 : i32 to vector<1x128xi32>
    %7 = arith.cmpi sge, %5, %6 : vector<1x128xi32>
    %cst_3 = arith.constant 0.000000e+00 : f32
    %8 = vector.broadcast %cst_3 : f32 to vector<128x128xf32>
    %9 = arith.maximumf %2, %8 : vector<128x128xf32>
    %cst_4 = arith.constant 3.000000e+38 : f32
    %10 = vector.shape_cast %7 : vector<1x128xi1> to vector<1x128xi1>
    %11 = vector.broadcast %10 : vector<1x128xi1> to vector<128x128xi1>
    %12 = vector.broadcast %cst_4 : f32 to vector<128x128xf32>
    %13 = arith.select %11, %12, %9 : vector<128x128xi1>, vector<128x128xf32>
    %c0_5 = arith.constant 0 : index
    %c0_6 = arith.constant 0 : index
    %14 = vector.load %arg4[%c0_5, %c0_6] : memref<128x128xf32, #tpu.memory_space<vmem>>, vector<128x128xf32>
    tpu.vector_store %arg4[%c0_5, %c0_6], %13 {strides = array<i32>} : memref<128x128xf32, #tpu.memory_space<vmem>>, vector<128x128xf32>,
    %15 = vector.extract_strided_slice %13 {offsets = [0, 0], sizes = [1, 128], strides = [1, 1]} : vector<128x128xf32> to vector<1x128xf32>
    %c0_7 = arith.constant 0 : index
    %c0_8 = arith.constant 0 : index
    %16 = vector.load %arg5[%c0_7, %c0_8] : memref<1x128xf32, #tpu.memory_space<vmem>>, vector<1x128xf32>
    tpu.vector_store %arg5[%c0_7, %c0_8], %15 {strides = array<i32>} : memref<1x128xf32, #tpu.memory_space<vmem>>, vector<1x128xf32>,
    %17 = tpu.iota {dimensions = array<i32: 0>} : vector<1x128xi32>
    %18 = tpu.iota {dimensions = array<i32: 1>} : vector<1x128xi32>
    %c128_i32 = arith.constant 128 : i32
    %19 = vector.broadcast %c128_i32 : i32 to vector<1x128xi32>
    %20 = arith.muli %17, %19 : vector<1x128xi32>
    %21 = arith.addi %20, %18 : vector<1x128xi32>
    %c0_i32_9 = arith.constant 0 : i32
    %22 = vector.broadcast %c0_i32_9 : i32 to vector<1x128xi32>
    %23 = arith.cmpi eq, %21, %22 : vector<1x128xi32>
    %c0_10 = arith.constant 0 : index
    %c0_11 = arith.constant 0 : index
    %24 = vector.load %arg5[%c0_10, %c0_11] : memref<1x128xf32, #tpu.memory_space<vmem>>, vector<1x128xf32>
    %cst_12 = arith.constant 3.000000e+38 : f32
    %25 = vector.broadcast %cst_12 : f32 to vector<1x128xf32>
    %26 = arith.select %23, %25, %24 : vector<1x128xi1>, vector<1x128xf32>
    %cst_13 = arith.constant 0.000000e+00 : f32
    %27 = vector.broadcast %cst_13 : f32 to vector<16x128xf32>
    %c0_14 = arith.constant 0 : index
    %c0_15 = arith.constant 0 : index
    %28 = vector.load %arg3[%c0_14, %c0_15] : memref<16x128xf32, #tpu.memory_space<vmem>>, vector<16x128xf32>
    tpu.vector_store %arg3[%c0_14, %c0_15], %27 {strides = array<i32>} : memref<16x128xf32, #tpu.memory_space<vmem>>, vector<16x128xf32>,
    %c0_i32_16 = arith.constant 0 : i32
    %29 = vector.shape_cast %26 : vector<1x128xf32> to vector<1x1x128xf32>
    %cst_17 = arith.constant dense<0x7F800000> : vector<1xf32>
    %30 = vector.multi_reduction <minimumf>, %29, %cst_17 [1, 2] : vector<1x1x128xf32> to vector<1xf32>
    %31 = vector.shape_cast %30 : vector<1xf32> to vector<1x1x1xf32>
    %32 = vector.extract %31[0, 0, 0] : f32 from vector<1x1x1xf32>
    %33 = vector.broadcast %32 : f32 to vector<1x1xf32>
    %34 = vector.broadcast %33 : vector<1x1xf32> to vector<1x128xf32>
    %35 = arith.cmpf oeq, %26, %34 : vector<1x128xf32>
    %c128_i32_18 = arith.constant 128 : i32
    %36 = vector.broadcast %c128_i32_18 : i32 to vector<1x128xi32>
    %37 = arith.select %35, %21, %36 : vector<1x128xi1>, vector<1x128xi32>
    %38 = vector.shape_cast %37 : vector<1x128xi32> to vector<1x1x128xi32>
    %cst_19 = arith.constant dense<2147483647> : vector<1xi32>
    %39 = vector.multi_reduction <minsi>, %38, %cst_19 [1, 2] : vector<1x1x128xi32> to vector<1xi32>
    %40 = vector.shape_cast %39 : vector<1xi32> to vector<1x1x1xi32>
    %41 = vector.extract %40[0, 0, 0] : i32 from vector<1x1x1xi32>
    %42 = vector.broadcast %41 : i32 to vector<1x1xi32>
    %43 = vector.shape_cast %33 : vector<1x1xf32> to vector<1x1xf32>
    %44 = vector.broadcast %43 : vector<1x1xf32> to vector<1x128xf32>
    %45 = arith.index_cast %c0_i32_16 : i32 to index
    %c0_20 = arith.constant 0 : index
    %46 = vector.load %arg3[%45, %c0_20] : memref<16x128xf32, #tpu.memory_space<vmem>>, vector<1x128xf32>
    tpu.vector_store %arg3[%45, %c0_20], %44 {strides = array<i32>} : memref<16x128xf32, #tpu.memory_space<vmem>>, vector<1x128xf32>,
    %47 = vector.extract %42[0, 0] : i32 from vector<1x1xi32>
    %48 = arith.index_cast %47 : i32 to index
    %c0_21 = arith.constant 0 : index
    %49 = vector.load %arg4[%48, %c0_21] : memref<128x128xf32, #tpu.memory_space<vmem>>, vector<1x128xf32>
    %c0_22 = arith.constant 0 : index
    %c0_23 = arith.constant 0 : index
    %50 = vector.load %arg5[%c0_22, %c0_23] : memref<1x128xf32, #tpu.memory_space<vmem>>, vector<1x128xf32>
    tpu.vector_store %arg5[%c0_22, %c0_23], %49 {strides = array<i32>} : memref<1x128xf32, #tpu.memory_space<vmem>>, vector<1x128xf32>,
    %c0_24 = arith.constant 0 : index
    %c0_25 = arith.constant 0 : index
    %51 = vector.load %arg5[%c0_24, %c0_25] : memref<1x128xf32, #tpu.memory_space<vmem>>, vector<1x128xf32>
    %52 = vector.broadcast %42 : vector<1x1xi32> to vector<1x128xi32>
    %53 = arith.cmpi eq, %21, %52 : vector<1x128xi32>
    %cst_26 = arith.constant 3.000000e+38 : f32
    %54 = vector.broadcast %cst_26 : f32 to vector<1x128xf32>
    %55 = arith.cmpf oeq, %26, %54 : vector<1x128xf32>
    %56 = arith.ori %55, %53 : vector<1x128xi1>
    %57 = arith.minimumf %26, %51 : vector<1x128xf32>
    %cst_27 = arith.constant 3.000000e+38 : f32
    %58 = vector.broadcast %cst_27 : f32 to vector<1x128xf32>
    %59 = arith.select %56, %58, %57 : vector<1x128xi1>, vector<1x128xf32>
    %c1_i32 = arith.constant 1 : i32
    %60 = vector.shape_cast %59 : vector<1x128xf32> to vector<1x1x128xf32>
    %cst_28 = arith.constant dense<0x7F800000> : vector<1xf32>
    %61 = vector.multi_reduction <minimumf>, %60, %cst_28 [1, 2] : vector<1x1x128xf32> to vector<1xf32>
    %62 = vector.shape_cast %61 : vector<1xf32> to vector<1x1x1xf32>
    %63 = vector.extract %62[0, 0, 0] : f32 from vector<1x1x1xf32>
    %64 = vector.broadcast %63 : f32 to vector<1x1xf32>
    %65 = vector.broadcast %64 : vector<1x1xf32> to vector<1x128xf32>
    %66 = arith.cmpf oeq, %59, %65 : vector<1x128xf32>
    %c128_i32_29 = arith.constant 128 : i32
    %67 = vector.broadcast %c128_i32_29 : i32 to vector<1x128xi32>
    %68 = arith.select %66, %21, %67 : vector<1x128xi1>, vector<1x128xi32>
    %69 = vector.shape_cast %68 : vector<1x128xi32> to vector<1x1x128xi32>
    %cst_30 = arith.constant dense<2147483647> : vector<1xi32>
    %70 = vector.multi_reduction <minsi>, %69, %cst_30 [1, 2] : vector<1x1x128xi32> to vector<1xi32>
    %71 = vector.shape_cast %70 : vector<1xi32> to vector<1x1x1xi32>
    %72 = vector.extract %71[0, 0, 0] : i32 from vector<1x1x1xi32>
    %73 = vector.broadcast %72 : i32 to vector<1x1xi32>
    %74 = vector.shape_cast %64 : vector<1x1xf32> to vector<1x1xf32>
    %75 = vector.broadcast %74 : vector<1x1xf32> to vector<1x128xf32>
    %76 = arith.index_cast %c1_i32 : i32 to index
    %c0_31 = arith.constant 0 : index
    %77 = vector.load %arg3[%76, %c0_31] : memref<16x128xf32, #tpu.memory_space<vmem>>, vector<1x128xf32>
    tpu.vector_store %arg3[%76, %c0_31], %75 {strides = array<i32>} : memref<16x128xf32, #tpu.memory_space<vmem>>, vector<1x128xf32>,
    %78 = vector.extract %73[0, 0] : i32 from vector<1x1xi32>
    %79 = arith.index_cast %78 : i32 to index
    %c0_32 = arith.constant 0 : index
    %80 = vector.load %arg4[%79, %c0_32] : memref<128x128xf32, #tpu.memory_space<vmem>>, vector<1x128xf32>
    %c0_33 = arith.constant 0 : index
    %c0_34 = arith.constant 0 : index
    %81 = vector.load %arg5[%c0_33, %c0_34] : memref<1x128xf32, #tpu.memory_space<vmem>>, vector<1x128xf32>
    tpu.vector_store %arg5[%c0_33, %c0_34], %80 {strides = array<i32>} : memref<1x128xf32, #tpu.memory_space<vmem>>, vector<1x128xf32>,
    %c0_35 = arith.constant 0 : index
    %c0_36 = arith.constant 0 : index
    %82 = vector.load %arg5[%c0_35, %c0_36] : memref<1x128xf32, #tpu.memory_space<vmem>>, vector<1x128xf32>
    %83 = vector.broadcast %73 : vector<1x1xi32> to vector<1x128xi32>
    %84 = arith.cmpi eq, %21, %83 : vector<1x128xi32>
    %cst_37 = arith.constant 3.000000e+38 : f32
    %85 = vector.broadcast %cst_37 : f32 to vector<1x128xf32>
    %86 = arith.cmpf oeq, %59, %85 : vector<1x128xf32>
    %87 = arith.ori %86, %84 : vector<1x128xi1>
    %88 = arith.minimumf %59, %82 : vector<1x128xf32>
    %cst_38 = arith.constant 3.000000e+38 : f32
    %89 = vector.broadcast %cst_38 : f32 to vector<1x128xf32>
    %90 = arith.select %87, %89, %88 : vector<1x128xi1>, vector<1x128xf32>
    %c2_i32 = arith.constant 2 : i32
    %91 = vector.shape_cast %90 : vector<1x128xf32> to vector<1x1x128xf32>
    %cst_39 = arith.constant dense<0x7F800000> : vector<1xf32>
    %92 = vector.multi_reduction <minimumf>, %91, %cst_39 [1, 2] : vector<1x1x128xf32> to vector<1xf32>
    %93 = vector.shape_cast %92 : vector<1xf32> to vector<1x1x1xf32>
    %94 = vector.extract %93[0, 0, 0] : f32 from vector<1x1x1xf32>
    %95 = vector.broadcast %94 : f32 to vector<1x1xf32>
    %96 = vector.broadcast %95 : vector<1x1xf32> to vector<1x128xf32>
    %97 = arith.cmpf oeq, %90, %96 : vector<1x128xf32>
    %c128_i32_40 = arith.constant 128 : i32
    %98 = vector.broadcast %c128_i32_40 : i32 to vector<1x128xi32>
    %99 = arith.select %97, %21, %98 : vector<1x128xi1>, vector<1x128xi32>
    %100 = vector.shape_cast %99 : vector<1x128xi32> to vector<1x1x128xi32>
    %cst_41 = arith.constant dense<2147483647> : vector<1xi32>
    %101 = vector.multi_reduction <minsi>, %100, %cst_41 [1, 2] : vector<1x1x128xi32> to vector<1xi32>
    %102 = vector.shape_cast %101 : vector<1xi32> to vector<1x1x1xi32>
    %103 = vector.extract %102[0, 0, 0] : i32 from vector<1x1x1xi32>
    %104 = vector.broadcast %103 : i32 to vector<1x1xi32>
    %105 = vector.shape_cast %95 : vector<1x1xf32> to vector<1x1xf32>
    %106 = vector.broadcast %105 : vector<1x1xf32> to vector<1x128xf32>
    %107 = arith.index_cast %c2_i32 : i32 to index
    %c0_42 = arith.constant 0 : index
    %108 = vector.load %arg3[%107, %c0_42] : memref<16x128xf32, #tpu.memory_space<vmem>>, vector<1x128xf32>
    tpu.vector_store %arg3[%107, %c0_42], %106 {strides = array<i32>} : memref<16x128xf32, #tpu.memory_space<vmem>>, vector<1x128xf32>,
    %109 = vector.extract %104[0, 0] : i32 from vector<1x1xi32>
    %110 = arith.index_cast %109 : i32 to index
    %c0_43 = arith.constant 0 : index
    %111 = vector.load %arg4[%110, %c0_43] : memref<128x128xf32, #tpu.memory_space<vmem>>, vector<1x128xf32>
    %c0_44 = arith.constant 0 : index
    %c0_45 = arith.constant 0 : index
    %112 = vector.load %arg5[%c0_44, %c0_45] : memref<1x128xf32, #tpu.memory_space<vmem>>, vector<1x128xf32>
    tpu.vector_store %arg5[%c0_44, %c0_45], %111 {strides = array<i32>} : memref<1x128xf32, #tpu.memory_space<vmem>>, vector<1x128xf32>,
    %c0_46 = arith.constant 0 : index
    %c0_47 = arith.constant 0 : index
    %113 = vector.load %arg5[%c0_46, %c0_47] : memref<1x128xf32, #tpu.memory_space<vmem>>, vector<1x128xf32>
    %114 = vector.broadcast %104 : vector<1x1xi32> to vector<1x128xi32>
    %115 = arith.cmpi eq, %21, %114 : vector<1x128xi32>
    %cst_48 = arith.constant 3.000000e+38 : f32
    %116 = vector.broadcast %cst_48 : f32 to vector<1x128xf32>
    %117 = arith.cmpf oeq, %90, %116 : vector<1x128xf32>
    %118 = arith.ori %117, %115 : vector<1x128xi1>
    %119 = arith.minimumf %90, %113 : vector<1x128xf32>
    %cst_49 = arith.constant 3.000000e+38 : f32
    %120 = vector.broadcast %cst_49 : f32 to vector<1x128xf32>
    %121 = arith.select %118, %120, %119 : vector<1x128xi1>, vector<1x128xf32>
    %c3_i32 = arith.constant 3 : i32
    %122 = vector.shape_cast %121 : vector<1x128xf32> to vector<1x1x128xf32>
    %cst_50 = arith.constant dense<0x7F800000> : vector<1xf32>
    %123 = vector.multi_reduction <minimumf>, %122, %cst_50 [1, 2] : vector<1x1x128xf32> to vector<1xf32>
    %124 = vector.shape_cast %123 : vector<1xf32> to vector<1x1x1xf32>
    %125 = vector.extract %124[0, 0, 0] : f32 from vector<1x1x1xf32>
    %126 = vector.broadcast %125 : f32 to vector<1x1xf32>
    %127 = vector.broadcast %126 : vector<1x1xf32> to vector<1x128xf32>
    %128 = arith.cmpf oeq, %121, %127 : vector<1x128xf32>
    %c128_i32_51 = arith.constant 128 : i32
    %129 = vector.broadcast %c128_i32_51 : i32 to vector<1x128xi32>
    %130 = arith.select %128, %21, %129 : vector<1x128xi1>, vector<1x128xi32>
    %131 = vector.shape_cast %130 : vector<1x128xi32> to vector<1x1x128xi32>
    %cst_52 = arith.constant dense<2147483647> : vector<1xi32>
    %132 = vector.multi_reduction <minsi>, %131, %cst_52 [1, 2] : vector<1x1x128xi32> to vector<1xi32>
    %133 = vector.shape_cast %132 : vector<1xi32> to vector<1x1x1xi32>
    %134 = vector.extract %133[0, 0, 0] : i32 from vector<1x1x1xi32>
    %135 = vector.broadcast %134 : i32 to vector<1x1xi32>
    %136 = vector.shape_cast %126 : vector<1x1xf32> to vector<1x1xf32>
    %137 = vector.broadcast %136 : vector<1x1xf32> to vector<1x128xf32>
    %138 = arith.index_cast %c3_i32 : i32 to index
    %c0_53 = arith.constant 0 : index
    %139 = vector.load %arg3[%138, %c0_53] : memref<16x128xf32, #tpu.memory_space<vmem>>, vector<1x128xf32>
    tpu.vector_store %arg3[%138, %c0_53], %137 {strides = array<i32>} : memref<16x128xf32, #tpu.memory_space<vmem>>, vector<1x128xf32>,
    %140 = vector.extract %135[0, 0] : i32 from vector<1x1xi32>
    %141 = arith.index_cast %140 : i32 to index
    %c0_54 = arith.constant 0 : index
    %142 = vector.load %arg4[%141, %c0_54] : memref<128x128xf32, #tpu.memory_space<vmem>>, vector<1x128xf32>
    %c0_55 = arith.constant 0 : index
    %c0_56 = arith.constant 0 : index
    %143 = vector.load %arg5[%c0_55, %c0_56] : memref<1x128xf32, #tpu.memory_space<vmem>>, vector<1x128xf32>
    tpu.vector_store %arg5[%c0_55, %c0_56], %142 {strides = array<i32>} : memref<1x128xf32, #tpu.memory_space<vmem>>, vector<1x128xf32>,
    %c0_57 = arith.constant 0 : index
    %c0_58 = arith.constant 0 : index
    %144 = vector.load %arg5[%c0_57, %c0_58] : memref<1x128xf32, #tpu.memory_space<vmem>>, vector<1x128xf32>
    %145 = vector.broadcast %135 : vector<1x1xi32> to vector<1x128xi32>
    %146 = arith.cmpi eq, %21, %145 : vector<1x128xi32>
    %cst_59 = arith.constant 3.000000e+38 : f32
    %147 = vector.broadcast %cst_59 : f32 to vector<1x128xf32>
    %148 = arith.cmpf oeq, %121, %147 : vector<1x128xf32>
    %149 = arith.ori %148, %146 : vector<1x128xi1>
    %150 = arith.minimumf %121, %144 : vector<1x128xf32>
    %cst_60 = arith.constant 3.000000e+38 : f32
    %151 = vector.broadcast %cst_60 : f32 to vector<1x128xf32>
    %152 = arith.select %149, %151, %150 : vector<1x128xi1>, vector<1x128xf32>
    %c4_i32 = arith.constant 4 : i32
    %153 = vector.shape_cast %152 : vector<1x128xf32> to vector<1x1x128xf32>
    %cst_61 = arith.constant dense<0x7F800000> : vector<1xf32>
    %154 = vector.multi_reduction <minimumf>, %153, %cst_61 [1, 2] : vector<1x1x128xf32> to vector<1xf32>
    %155 = vector.shape_cast %154 : vector<1xf32> to vector<1x1x1xf32>
    %156 = vector.extract %155[0, 0, 0] : f32 from vector<1x1x1xf32>
    %157 = vector.broadcast %156 : f32 to vector<1x1xf32>
    %158 = vector.broadcast %157 : vector<1x1xf32> to vector<1x128xf32>
    %159 = arith.cmpf oeq, %152, %158 : vector<1x128xf32>
    %c128_i32_62 = arith.constant 128 : i32
    %160 = vector.broadcast %c128_i32_62 : i32 to vector<1x128xi32>
    %161 = arith.select %159, %21, %160 : vector<1x128xi1>, vector<1x128xi32>
    %162 = vector.shape_cast %161 : vector<1x128xi32> to vector<1x1x128xi32>
    %cst_63 = arith.constant dense<2147483647> : vector<1xi32>
    %163 = vector.multi_reduction <minsi>, %162, %cst_63 [1, 2] : vector<1x1x128xi32> to vector<1xi32>
    %164 = vector.shape_cast %163 : vector<1xi32> to vector<1x1x1xi32>
    %165 = vector.extract %164[0, 0, 0] : i32 from vector<1x1x1xi32>
    %166 = vector.broadcast %165 : i32 to vector<1x1xi32>
    %167 = vector.shape_cast %157 : vector<1x1xf32> to vector<1x1xf32>
    %168 = vector.broadcast %167 : vector<1x1xf32> to vector<1x128xf32>
    %169 = arith.index_cast %c4_i32 : i32 to index
    %c0_64 = arith.constant 0 : index
    %170 = vector.load %arg3[%169, %c0_64] : memref<16x128xf32, #tpu.memory_space<vmem>>, vector<1x128xf32>
    tpu.vector_store %arg3[%169, %c0_64], %168 {strides = array<i32>} : memref<16x128xf32, #tpu.memory_space<vmem>>, vector<1x128xf32>,
    %171 = vector.extract %166[0, 0] : i32 from vector<1x1xi32>
    %172 = arith.index_cast %171 : i32 to index
    %c0_65 = arith.constant 0 : index
    %173 = vector.load %arg4[%172, %c0_65] : memref<128x128xf32, #tpu.memory_space<vmem>>, vector<1x128xf32>
    %c0_66 = arith.constant 0 : index
    %c0_67 = arith.constant 0 : index
    %174 = vector.load %arg5[%c0_66, %c0_67] : memref<1x128xf32, #tpu.memory_space<vmem>>, vector<1x128xf32>
    tpu.vector_store %arg5[%c0_66, %c0_67], %173 {strides = array<i32>} : memref<1x128xf32, #tpu.memory_space<vmem>>, vector<1x128xf32>,
    %c0_68 = arith.constant 0 : index
    %c0_69 = arith.constant 0 : index
    %175 = vector.load %arg5[%c0_68, %c0_69] : memref<1x128xf32, #tpu.memory_space<vmem>>, vector<1x128xf32>
    %176 = vector.broadcast %166 : vector<1x1xi32> to vector<1x128xi32>
    %177 = arith.cmpi eq, %21, %176 : vector<1x128xi32>
    %cst_70 = arith.constant 3.000000e+38 : f32
    %178 = vector.broadcast %cst_70 : f32 to vector<1x128xf32>
    %179 = arith.cmpf oeq, %152, %178 : vector<1x128xf32>
    %180 = arith.ori %179, %177 : vector<1x128xi1>
    %181 = arith.minimumf %152, %175 : vector<1x128xf32>
    %cst_71 = arith.constant 3.000000e+38 : f32
    %182 = vector.broadcast %cst_71 : f32 to vector<1x128xf32>
    %183 = arith.select %180, %182, %181 : vector<1x128xi1>, vector<1x128xf32>
    %c5_i32 = arith.constant 5 : i32
    %184 = vector.shape_cast %183 : vector<1x128xf32> to vector<1x1x128xf32>
    %cst_72 = arith.constant dense<0x7F800000> : vector<1xf32>
    %185 = vector.multi_reduction <minimumf>, %184, %cst_72 [1, 2] : vector<1x1x128xf32> to vector<1xf32>
    %186 = vector.shape_cast %185 : vector<1xf32> to vector<1x1x1xf32>
    %187 = vector.extract %186[0, 0, 0] : f32 from vector<1x1x1xf32>
    %188 = vector.broadcast %187 : f32 to vector<1x1xf32>
    %189 = vector.broadcast %188 : vector<1x1xf32> to vector<1x128xf32>
    %190 = arith.cmpf oeq, %183, %189 : vector<1x128xf32>
    %c128_i32_73 = arith.constant 128 : i32
    %191 = vector.broadcast %c128_i32_73 : i32 to vector<1x128xi32>
    %192 = arith.select %190, %21, %191 : vector<1x128xi1>, vector<1x128xi32>
    %193 = vector.shape_cast %192 : vector<1x128xi32> to vector<1x1x128xi32>
    %cst_74 = arith.constant dense<2147483647> : vector<1xi32>
    %194 = vector.multi_reduction <minsi>, %193, %cst_74 [1, 2] : vector<1x1x128xi32> to vector<1xi32>
    %195 = vector.shape_cast %194 : vector<1xi32> to vector<1x1x1xi32>
    %196 = vector.extract %195[0, 0, 0] : i32 from vector<1x1x1xi32>
    %197 = vector.broadcast %196 : i32 to vector<1x1xi32>
    %198 = vector.shape_cast %188 : vector<1x1xf32> to vector<1x1xf32>
    %199 = vector.broadcast %198 : vector<1x1xf32> to vector<1x128xf32>
    %200 = arith.index_cast %c5_i32 : i32 to index
    %c0_75 = arith.constant 0 : index
    %201 = vector.load %arg3[%200, %c0_75] : memref<16x128xf32, #tpu.memory_space<vmem>>, vector<1x128xf32>
    tpu.vector_store %arg3[%200, %c0_75], %199 {strides = array<i32>} : memref<16x128xf32, #tpu.memory_space<vmem>>, vector<1x128xf32>,
    %202 = vector.extract %197[0, 0] : i32 from vector<1x1xi32>
    %203 = arith.index_cast %202 : i32 to index
    %c0_76 = arith.constant 0 : index
    %204 = vector.load %arg4[%203, %c0_76] : memref<128x128xf32, #tpu.memory_space<vmem>>, vector<1x128xf32>
    %c0_77 = arith.constant 0 : index
    %c0_78 = arith.constant 0 : index
    %205 = vector.load %arg5[%c0_77, %c0_78] : memref<1x128xf32, #tpu.memory_space<vmem>>, vector<1x128xf32>
    tpu.vector_store %arg5[%c0_77, %c0_78], %204 {strides = array<i32>} : memref<1x128xf32, #tpu.memory_space<vmem>>, vector<1x128xf32>,
    %c0_79 = arith.constant 0 : index
    %c0_80 = arith.constant 0 : index
    %206 = vector.load %arg5[%c0_79, %c0_80] : memref<1x128xf32, #tpu.memory_space<vmem>>, vector<1x128xf32>
    %207 = vector.broadcast %197 : vector<1x1xi32> to vector<1x128xi32>
    %208 = arith.cmpi eq, %21, %207 : vector<1x128xi32>
    %cst_81 = arith.constant 3.000000e+38 : f32
    %209 = vector.broadcast %cst_81 : f32 to vector<1x128xf32>
    %210 = arith.cmpf oeq, %183, %209 : vector<1x128xf32>
    %211 = arith.ori %210, %208 : vector<1x128xi1>
    %212 = arith.minimumf %183, %206 : vector<1x128xf32>
    %cst_82 = arith.constant 3.000000e+38 : f32
    %213 = vector.broadcast %cst_82 : f32 to vector<1x128xf32>
    %214 = arith.select %211, %213, %212 : vector<1x128xi1>, vector<1x128xf32>
    %c6_i32 = arith.constant 6 : i32
    %215 = vector.shape_cast %214 : vector<1x128xf32> to vector<1x1x128xf32>
    %cst_83 = arith.constant dense<0x7F800000> : vector<1xf32>
    %216 = vector.multi_reduction <minimumf>, %215, %cst_83 [1, 2] : vector<1x1x128xf32> to vector<1xf32>
    %217 = vector.shape_cast %216 : vector<1xf32> to vector<1x1x1xf32>
    %218 = vector.extract %217[0, 0, 0] : f32 from vector<1x1x1xf32>
    %219 = vector.broadcast %218 : f32 to vector<1x1xf32>
    %220 = vector.broadcast %219 : vector<1x1xf32> to vector<1x128xf32>
    %221 = arith.cmpf oeq, %214, %220 : vector<1x128xf32>
    %c128_i32_84 = arith.constant 128 : i32
    %222 = vector.broadcast %c128_i32_84 : i32 to vector<1x128xi32>
    %223 = arith.select %221, %21, %222 : vector<1x128xi1>, vector<1x128xi32>
    %224 = vector.shape_cast %223 : vector<1x128xi32> to vector<1x1x128xi32>
    %cst_85 = arith.constant dense<2147483647> : vector<1xi32>
    %225 = vector.multi_reduction <minsi>, %224, %cst_85 [1, 2] : vector<1x1x128xi32> to vector<1xi32>
    %226 = vector.shape_cast %225 : vector<1xi32> to vector<1x1x1xi32>
    %227 = vector.extract %226[0, 0, 0] : i32 from vector<1x1x1xi32>
    %228 = vector.broadcast %227 : i32 to vector<1x1xi32>
    %229 = vector.shape_cast %219 : vector<1x1xf32> to vector<1x1xf32>
    %230 = vector.broadcast %229 : vector<1x1xf32> to vector<1x128xf32>
    %231 = arith.index_cast %c6_i32 : i32 to index
    %c0_86 = arith.constant 0 : index
    %232 = vector.load %arg3[%231, %c0_86] : memref<16x128xf32, #tpu.memory_space<vmem>>, vector<1x128xf32>
    tpu.vector_store %arg3[%231, %c0_86], %230 {strides = array<i32>} : memref<16x128xf32, #tpu.memory_space<vmem>>, vector<1x128xf32>,
    %233 = vector.extract %228[0, 0] : i32 from vector<1x1xi32>
    %234 = arith.index_cast %233 : i32 to index
    %c0_87 = arith.constant 0 : index
    %235 = vector.load %arg4[%234, %c0_87] : memref<128x128xf32, #tpu.memory_space<vmem>>, vector<1x128xf32>
    %c0_88 = arith.constant 0 : index
    %c0_89 = arith.constant 0 : index
    %236 = vector.load %arg5[%c0_88, %c0_89] : memref<1x128xf32, #tpu.memory_space<vmem>>, vector<1x128xf32>
    tpu.vector_store %arg5[%c0_88, %c0_89], %235 {strides = array<i32>} : memref<1x128xf32, #tpu.memory_space<vmem>>, vector<1x128xf32>,
    %c0_90 = arith.constant 0 : index
    %c0_91 = arith.constant 0 : index
    %237 = vector.load %arg5[%c0_90, %c0_91] : memref<1x128xf32, #tpu.memory_space<vmem>>, vector<1x128xf32>
    %238 = vector.broadcast %228 : vector<1x1xi32> to vector<1x128xi32>
    %239 = arith.cmpi eq, %21, %238 : vector<1x128xi32>
    %cst_92 = arith.constant 3.000000e+38 : f32
    %240 = vector.broadcast %cst_92 : f32 to vector<1x128xf32>
    %241 = arith.cmpf oeq, %214, %240 : vector<1x128xf32>
    %242 = arith.ori %241, %239 : vector<1x128xi1>
    %243 = arith.minimumf %214, %237 : vector<1x128xf32>
    %cst_93 = arith.constant 3.000000e+38 : f32
    %244 = vector.broadcast %cst_93 : f32 to vector<1x128xf32>
    %245 = arith.select %242, %244, %243 : vector<1x128xi1>, vector<1x128xf32>
    %c7_i32 = arith.constant 7 : i32
    %246 = vector.shape_cast %245 : vector<1x128xf32> to vector<1x1x128xf32>
    %cst_94 = arith.constant dense<0x7F800000> : vector<1xf32>
    %247 = vector.multi_reduction <minimumf>, %246, %cst_94 [1, 2] : vector<1x1x128xf32> to vector<1xf32>
    %248 = vector.shape_cast %247 : vector<1xf32> to vector<1x1x1xf32>
    %249 = vector.extract %248[0, 0, 0] : f32 from vector<1x1x1xf32>
    %250 = vector.broadcast %249 : f32 to vector<1x1xf32>
    %251 = vector.broadcast %250 : vector<1x1xf32> to vector<1x128xf32>
    %252 = arith.cmpf oeq, %245, %251 : vector<1x128xf32>
    %c128_i32_95 = arith.constant 128 : i32
    %253 = vector.broadcast %c128_i32_95 : i32 to vector<1x128xi32>
    %254 = arith.select %252, %21, %253 : vector<1x128xi1>, vector<1x128xi32>
    %255 = vector.shape_cast %254 : vector<1x128xi32> to vector<1x1x128xi32>
    %cst_96 = arith.constant dense<2147483647> : vector<1xi32>
    %256 = vector.multi_reduction <minsi>, %255, %cst_96 [1, 2] : vector<1x1x128xi32> to vector<1xi32>
    %257 = vector.shape_cast %256 : vector<1xi32> to vector<1x1x1xi32>
    %258 = vector.extract %257[0, 0, 0] : i32 from vector<1x1x1xi32>
    %259 = vector.broadcast %258 : i32 to vector<1x1xi32>
    %260 = vector.shape_cast %250 : vector<1x1xf32> to vector<1x1xf32>
    %261 = vector.broadcast %260 : vector<1x1xf32> to vector<1x128xf32>
    %262 = arith.index_cast %c7_i32 : i32 to index
    %c0_97 = arith.constant 0 : index
    %263 = vector.load %arg3[%262, %c0_97] : memref<16x128xf32, #tpu.memory_space<vmem>>, vector<1x128xf32>
    tpu.vector_store %arg3[%262, %c0_97], %261 {strides = array<i32>} : memref<16x128xf32, #tpu.memory_space<vmem>>, vector<1x128xf32>,
    %264 = vector.extract %259[0, 0] : i32 from vector<1x1xi32>
    %265 = arith.index_cast %264 : i32 to index
    %c0_98 = arith.constant 0 : index
    %266 = vector.load %arg4[%265, %c0_98] : memref<128x128xf32, #tpu.memory_space<vmem>>, vector<1x128xf32>
    %c0_99 = arith.constant 0 : index
    %c0_100 = arith.constant 0 : index
    %267 = vector.load %arg5[%c0_99, %c0_100] : memref<1x128xf32, #tpu.memory_space<vmem>>, vector<1x128xf32>
    tpu.vector_store %arg5[%c0_99, %c0_100], %266 {strides = array<i32>} : memref<1x128xf32, #tpu.memory_space<vmem>>, vector<1x128xf32>,
    %c0_101 = arith.constant 0 : index
    %c0_102 = arith.constant 0 : index
    %268 = vector.load %arg5[%c0_101, %c0_102] : memref<1x128xf32, #tpu.memory_space<vmem>>, vector<1x128xf32>
    %269 = vector.broadcast %259 : vector<1x1xi32> to vector<1x128xi32>
    %270 = arith.cmpi eq, %21, %269 : vector<1x128xi32>
    %cst_103 = arith.constant 3.000000e+38 : f32
    %271 = vector.broadcast %cst_103 : f32 to vector<1x128xf32>
    %272 = arith.cmpf oeq, %245, %271 : vector<1x128xf32>
    %273 = arith.ori %272, %270 : vector<1x128xi1>
    %274 = arith.minimumf %245, %268 : vector<1x128xf32>
    %cst_104 = arith.constant 3.000000e+38 : f32
    %275 = vector.broadcast %cst_104 : f32 to vector<1x128xf32>
    %276 = arith.select %273, %275, %274 : vector<1x128xi1>, vector<1x128xf32>
    %c8_i32 = arith.constant 8 : i32
    %277 = vector.shape_cast %276 : vector<1x128xf32> to vector<1x1x128xf32>
    %cst_105 = arith.constant dense<0x7F800000> : vector<1xf32>
    %278 = vector.multi_reduction <minimumf>, %277, %cst_105 [1, 2] : vector<1x1x128xf32> to vector<1xf32>
    %279 = vector.shape_cast %278 : vector<1xf32> to vector<1x1x1xf32>
    %280 = vector.extract %279[0, 0, 0] : f32 from vector<1x1x1xf32>
    %281 = vector.broadcast %280 : f32 to vector<1x1xf32>
    %282 = vector.broadcast %281 : vector<1x1xf32> to vector<1x128xf32>
    %283 = arith.cmpf oeq, %276, %282 : vector<1x128xf32>
    %c128_i32_106 = arith.constant 128 : i32
    %284 = vector.broadcast %c128_i32_106 : i32 to vector<1x128xi32>
    %285 = arith.select %283, %21, %284 : vector<1x128xi1>, vector<1x128xi32>
    %286 = vector.shape_cast %285 : vector<1x128xi32> to vector<1x1x128xi32>
    %cst_107 = arith.constant dense<2147483647> : vector<1xi32>
    %287 = vector.multi_reduction <minsi>, %286, %cst_107 [1, 2] : vector<1x1x128xi32> to vector<1xi32>
    %288 = vector.shape_cast %287 : vector<1xi32> to vector<1x1x1xi32>
    %289 = vector.extract %288[0, 0, 0] : i32 from vector<1x1x1xi32>
    %290 = vector.broadcast %289 : i32 to vector<1x1xi32>
    %291 = vector.shape_cast %281 : vector<1x1xf32> to vector<1x1xf32>
    %292 = vector.broadcast %291 : vector<1x1xf32> to vector<1x128xf32>
    %293 = arith.index_cast %c8_i32 : i32 to index
    %c0_108 = arith.constant 0 : index
    %294 = vector.load %arg3[%293, %c0_108] : memref<16x128xf32, #tpu.memory_space<vmem>>, vector<1x128xf32>
    tpu.vector_store %arg3[%293, %c0_108], %292 {strides = array<i32>} : memref<16x128xf32, #tpu.memory_space<vmem>>, vector<1x128xf32>,
    %295 = vector.extract %290[0, 0] : i32 from vector<1x1xi32>
    %296 = arith.index_cast %295 : i32 to index
    %c0_109 = arith.constant 0 : index
    %297 = vector.load %arg4[%296, %c0_109] : memref<128x128xf32, #tpu.memory_space<vmem>>, vector<1x128xf32>
    %c0_110 = arith.constant 0 : index
    %c0_111 = arith.constant 0 : index
    %298 = vector.load %arg5[%c0_110, %c0_111] : memref<1x128xf32, #tpu.memory_space<vmem>>, vector<1x128xf32>
    tpu.vector_store %arg5[%c0_110, %c0_111], %297 {strides = array<i32>} : memref<1x128xf32, #tpu.memory_space<vmem>>, vector<1x128xf32>,
    %c0_112 = arith.constant 0 : index
    %c0_113 = arith.constant 0 : index
    %299 = vector.load %arg5[%c0_112, %c0_113] : memref<1x128xf32, #tpu.memory_space<vmem>>, vector<1x128xf32>
    %300 = vector.broadcast %290 : vector<1x1xi32> to vector<1x128xi32>
    %301 = arith.cmpi eq, %21, %300 : vector<1x128xi32>
    %cst_114 = arith.constant 3.000000e+38 : f32
    %302 = vector.broadcast %cst_114 : f32 to vector<1x128xf32>
    %303 = arith.cmpf oeq, %276, %302 : vector<1x128xf32>
    %304 = arith.ori %303, %301 : vector<1x128xi1>
    %305 = arith.minimumf %276, %299 : vector<1x128xf32>
    %cst_115 = arith.constant 3.000000e+38 : f32
    %306 = vector.broadcast %cst_115 : f32 to vector<1x128xf32>
    %307 = arith.select %304, %306, %305 : vector<1x128xi1>, vector<1x128xf32>
    %c9_i32 = arith.constant 9 : i32
    %308 = vector.shape_cast %307 : vector<1x128xf32> to vector<1x1x128xf32>
    %cst_116 = arith.constant dense<0x7F800000> : vector<1xf32>
    %309 = vector.multi_reduction <minimumf>, %308, %cst_116 [1, 2] : vector<1x1x128xf32> to vector<1xf32>
    %310 = vector.shape_cast %309 : vector<1xf32> to vector<1x1x1xf32>
    %311 = vector.extract %310[0, 0, 0] : f32 from vector<1x1x1xf32>
    %312 = vector.broadcast %311 : f32 to vector<1x1xf32>
    %313 = vector.broadcast %312 : vector<1x1xf32> to vector<1x128xf32>
    %314 = arith.cmpf oeq, %307, %313 : vector<1x128xf32>
    %c128_i32_117 = arith.constant 128 : i32
    %315 = vector.broadcast %c128_i32_117 : i32 to vector<1x128xi32>
    %316 = arith.select %314, %21, %315 : vector<1x128xi1>, vector<1x128xi32>
    %317 = vector.shape_cast %316 : vector<1x128xi32> to vector<1x1x128xi32>
    %cst_118 = arith.constant dense<2147483647> : vector<1xi32>
    %318 = vector.multi_reduction <minsi>, %317, %cst_118 [1, 2] : vector<1x1x128xi32> to vector<1xi32>
    %319 = vector.shape_cast %318 : vector<1xi32> to vector<1x1x1xi32>
    %320 = vector.extract %319[0, 0, 0] : i32 from vector<1x1x1xi32>
    %321 = vector.broadcast %320 : i32 to vector<1x1xi32>
    %322 = vector.shape_cast %312 : vector<1x1xf32> to vector<1x1xf32>
    %323 = vector.broadcast %322 : vector<1x1xf32> to vector<1x128xf32>
    %324 = arith.index_cast %c9_i32 : i32 to index
    %c0_119 = arith.constant 0 : index
    %325 = vector.load %arg3[%324, %c0_119] : memref<16x128xf32, #tpu.memory_space<vmem>>, vector<1x128xf32>
    tpu.vector_store %arg3[%324, %c0_119], %323 {strides = array<i32>} : memref<16x128xf32, #tpu.memory_space<vmem>>, vector<1x128xf32>,
    %326 = vector.extract %321[0, 0] : i32 from vector<1x1xi32>
    %327 = arith.index_cast %326 : i32 to index
    %c0_120 = arith.constant 0 : index
    %328 = vector.load %arg4[%327, %c0_120] : memref<128x128xf32, #tpu.memory_space<vmem>>, vector<1x128xf32>
    %c0_121 = arith.constant 0 : index
    %c0_122 = arith.constant 0 : index
    %329 = vector.load %arg5[%c0_121, %c0_122] : memref<1x128xf32, #tpu.memory_space<vmem>>, vector<1x128xf32>
    tpu.vector_store %arg5[%c0_121, %c0_122], %328 {strides = array<i32>} : memref<1x128xf32, #tpu.memory_space<vmem>>, vector<1x128xf32>,
    %c0_123 = arith.constant 0 : index
    %c0_124 = arith.constant 0 : index
    %330 = vector.load %arg5[%c0_123, %c0_124] : memref<1x128xf32, #tpu.memory_space<vmem>>, vector<1x128xf32>
    %331 = vector.broadcast %321 : vector<1x1xi32> to vector<1x128xi32>
    %332 = arith.cmpi eq, %21, %331 : vector<1x128xi32>
    %cst_125 = arith.constant 3.000000e+38 : f32
    %333 = vector.broadcast %cst_125 : f32 to vector<1x128xf32>
    %334 = arith.cmpf oeq, %307, %333 : vector<1x128xf32>
    %335 = arith.ori %334, %332 : vector<1x128xi1>
    %336 = arith.minimumf %307, %330 : vector<1x128xf32>
    %cst_126 = arith.constant 3.000000e+38 : f32
    %337 = vector.broadcast %cst_126 : f32 to vector<1x128xf32>
    %338 = arith.select %335, %337, %336 : vector<1x128xi1>, vector<1x128xf32>
    %c10_i32 = arith.constant 10 : i32
    %339 = vector.shape_cast %338 : vector<1x128xf32> to vector<1x1x128xf32>
    %cst_127 = arith.constant dense<0x7F800000> : vector<1xf32>
    %340 = vector.multi_reduction <minimumf>, %339, %cst_127 [1, 2] : vector<1x1x128xf32> to vector<1xf32>
    %341 = vector.shape_cast %340 : vector<1xf32> to vector<1x1x1xf32>
    %342 = vector.extract %341[0, 0, 0] : f32 from vector<1x1x1xf32>
    %343 = vector.broadcast %342 : f32 to vector<1x1xf32>
    %344 = vector.broadcast %343 : vector<1x1xf32> to vector<1x128xf32>
    %345 = arith.cmpf oeq, %338, %344 : vector<1x128xf32>
    %c128_i32_128 = arith.constant 128 : i32
    %346 = vector.broadcast %c128_i32_128 : i32 to vector<1x128xi32>
    %347 = arith.select %345, %21, %346 : vector<1x128xi1>, vector<1x128xi32>
    %348 = vector.shape_cast %347 : vector<1x128xi32> to vector<1x1x128xi32>
    %cst_129 = arith.constant dense<2147483647> : vector<1xi32>
    %349 = vector.multi_reduction <minsi>, %348, %cst_129 [1, 2] : vector<1x1x128xi32> to vector<1xi32>
    %350 = vector.shape_cast %349 : vector<1xi32> to vector<1x1x1xi32>
    %351 = vector.extract %350[0, 0, 0] : i32 from vector<1x1x1xi32>
    %352 = vector.broadcast %351 : i32 to vector<1x1xi32>
    %353 = vector.shape_cast %343 : vector<1x1xf32> to vector<1x1xf32>
    %354 = vector.broadcast %353 : vector<1x1xf32> to vector<1x128xf32>
    %355 = arith.index_cast %c10_i32 : i32 to index
    %c0_130 = arith.constant 0 : index
    %356 = vector.load %arg3[%355, %c0_130] : memref<16x128xf32, #tpu.memory_space<vmem>>, vector<1x128xf32>
    tpu.vector_store %arg3[%355, %c0_130], %354 {strides = array<i32>} : memref<16x128xf32, #tpu.memory_space<vmem>>, vector<1x128xf32>,
    %357 = vector.extract %352[0, 0] : i32 from vector<1x1xi32>
    %358 = arith.index_cast %357 : i32 to index
    %c0_131 = arith.constant 0 : index
    %359 = vector.load %arg4[%358, %c0_131] : memref<128x128xf32, #tpu.memory_space<vmem>>, vector<1x128xf32>
    %c0_132 = arith.constant 0 : index
    %c0_133 = arith.constant 0 : index
    %360 = vector.load %arg5[%c0_132, %c0_133] : memref<1x128xf32, #tpu.memory_space<vmem>>, vector<1x128xf32>
    tpu.vector_store %arg5[%c0_132, %c0_133], %359 {strides = array<i32>} : memref<1x128xf32, #tpu.memory_space<vmem>>, vector<1x128xf32>,
    %c0_134 = arith.constant 0 : index
    %c0_135 = arith.constant 0 : index
    %361 = vector.load %arg5[%c0_134, %c0_135] : memref<1x128xf32, #tpu.memory_space<vmem>>, vector<1x128xf32>
    %362 = vector.broadcast %352 : vector<1x1xi32> to vector<1x128xi32>
    %363 = arith.cmpi eq, %21, %362 : vector<1x128xi32>
    %cst_136 = arith.constant 3.000000e+38 : f32
    %364 = vector.broadcast %cst_136 : f32 to vector<1x128xf32>
    %365 = arith.cmpf oeq, %338, %364 : vector<1x128xf32>
    %366 = arith.ori %365, %363 : vector<1x128xi1>
    %367 = arith.minimumf %338, %361 : vector<1x128xf32>
    %cst_137 = arith.constant 3.000000e+38 : f32
    %368 = vector.broadcast %cst_137 : f32 to vector<1x128xf32>
    %369 = arith.select %366, %368, %367 : vector<1x128xi1>, vector<1x128xf32>
    %c11_i32 = arith.constant 11 : i32
    %370 = vector.shape_cast %369 : vector<1x128xf32> to vector<1x1x128xf32>
    %cst_138 = arith.constant dense<0x7F800000> : vector<1xf32>
    %371 = vector.multi_reduction <minimumf>, %370, %cst_138 [1, 2] : vector<1x1x128xf32> to vector<1xf32>
    %372 = vector.shape_cast %371 : vector<1xf32> to vector<1x1x1xf32>
    %373 = vector.extract %372[0, 0, 0] : f32 from vector<1x1x1xf32>
    %374 = vector.broadcast %373 : f32 to vector<1x1xf32>
    %375 = vector.broadcast %374 : vector<1x1xf32> to vector<1x128xf32>
    %376 = arith.cmpf oeq, %369, %375 : vector<1x128xf32>
    %c128_i32_139 = arith.constant 128 : i32
    %377 = vector.broadcast %c128_i32_139 : i32 to vector<1x128xi32>
    %378 = arith.select %376, %21, %377 : vector<1x128xi1>, vector<1x128xi32>
    %379 = vector.shape_cast %378 : vector<1x128xi32> to vector<1x1x128xi32>
    %cst_140 = arith.constant dense<2147483647> : vector<1xi32>
    %380 = vector.multi_reduction <minsi>, %379, %cst_140 [1, 2] : vector<1x1x128xi32> to vector<1xi32>
    %381 = vector.shape_cast %380 : vector<1xi32> to vector<1x1x1xi32>
    %382 = vector.extract %381[0, 0, 0] : i32 from vector<1x1x1xi32>
    %383 = vector.broadcast %382 : i32 to vector<1x1xi32>
    %384 = vector.shape_cast %374 : vector<1x1xf32> to vector<1x1xf32>
    %385 = vector.broadcast %384 : vector<1x1xf32> to vector<1x128xf32>
    %386 = arith.index_cast %c11_i32 : i32 to index
    %c0_141 = arith.constant 0 : index
    %387 = vector.load %arg3[%386, %c0_141] : memref<16x128xf32, #tpu.memory_space<vmem>>, vector<1x128xf32>
    tpu.vector_store %arg3[%386, %c0_141], %385 {strides = array<i32>} : memref<16x128xf32, #tpu.memory_space<vmem>>, vector<1x128xf32>,
    %388 = vector.extract %383[0, 0] : i32 from vector<1x1xi32>
    %389 = arith.index_cast %388 : i32 to index
    %c0_142 = arith.constant 0 : index
    %390 = vector.load %arg4[%389, %c0_142] : memref<128x128xf32, #tpu.memory_space<vmem>>, vector<1x128xf32>
    %c0_143 = arith.constant 0 : index
    %c0_144 = arith.constant 0 : index
    %391 = vector.load %arg5[%c0_143, %c0_144] : memref<1x128xf32, #tpu.memory_space<vmem>>, vector<1x128xf32>
    tpu.vector_store %arg5[%c0_143, %c0_144], %390 {strides = array<i32>} : memref<1x128xf32, #tpu.memory_space<vmem>>, vector<1x128xf32>,
    %c0_145 = arith.constant 0 : index
    %c0_146 = arith.constant 0 : index
    %392 = vector.load %arg5[%c0_145, %c0_146] : memref<1x128xf32, #tpu.memory_space<vmem>>, vector<1x128xf32>
    %393 = vector.broadcast %383 : vector<1x1xi32> to vector<1x128xi32>
    %394 = arith.cmpi eq, %21, %393 : vector<1x128xi32>
    %cst_147 = arith.constant 3.000000e+38 : f32
    %395 = vector.broadcast %cst_147 : f32 to vector<1x128xf32>
    %396 = arith.cmpf oeq, %369, %395 : vector<1x128xf32>
    %397 = arith.ori %396, %394 : vector<1x128xi1>
    %398 = arith.minimumf %369, %392 : vector<1x128xf32>
    %cst_148 = arith.constant 3.000000e+38 : f32
    %399 = vector.broadcast %cst_148 : f32 to vector<1x128xf32>
    %400 = arith.select %397, %399, %398 : vector<1x128xi1>, vector<1x128xf32>
    %c12_i32 = arith.constant 12 : i32
    %401 = vector.shape_cast %400 : vector<1x128xf32> to vector<1x1x128xf32>
    %cst_149 = arith.constant dense<0x7F800000> : vector<1xf32>
    %402 = vector.multi_reduction <minimumf>, %401, %cst_149 [1, 2] : vector<1x1x128xf32> to vector<1xf32>
    %403 = vector.shape_cast %402 : vector<1xf32> to vector<1x1x1xf32>
    %404 = vector.extract %403[0, 0, 0] : f32 from vector<1x1x1xf32>
    %405 = vector.broadcast %404 : f32 to vector<1x1xf32>
    %406 = vector.broadcast %405 : vector<1x1xf32> to vector<1x128xf32>
    %407 = arith.cmpf oeq, %400, %406 : vector<1x128xf32>
    %c128_i32_150 = arith.constant 128 : i32
    %408 = vector.broadcast %c128_i32_150 : i32 to vector<1x128xi32>
    %409 = arith.select %407, %21, %408 : vector<1x128xi1>, vector<1x128xi32>
    %410 = vector.shape_cast %409 : vector<1x128xi32> to vector<1x1x128xi32>
    %cst_151 = arith.constant dense<2147483647> : vector<1xi32>
    %411 = vector.multi_reduction <minsi>, %410, %cst_151 [1, 2] : vector<1x1x128xi32> to vector<1xi32>
    %412 = vector.shape_cast %411 : vector<1xi32> to vector<1x1x1xi32>
    %413 = vector.extract %412[0, 0, 0] : i32 from vector<1x1x1xi32>
    %414 = vector.broadcast %413 : i32 to vector<1x1xi32>
    %415 = vector.shape_cast %405 : vector<1x1xf32> to vector<1x1xf32>
    %416 = vector.broadcast %415 : vector<1x1xf32> to vector<1x128xf32>
    %417 = arith.index_cast %c12_i32 : i32 to index
    %c0_152 = arith.constant 0 : index
    %418 = vector.load %arg3[%417, %c0_152] : memref<16x128xf32, #tpu.memory_space<vmem>>, vector<1x128xf32>
    tpu.vector_store %arg3[%417, %c0_152], %416 {strides = array<i32>} : memref<16x128xf32, #tpu.memory_space<vmem>>, vector<1x128xf32>,
    %419 = vector.extract %414[0, 0] : i32 from vector<1x1xi32>
    %420 = arith.index_cast %419 : i32 to index
    %c0_153 = arith.constant 0 : index
    %421 = vector.load %arg4[%420, %c0_153] : memref<128x128xf32, #tpu.memory_space<vmem>>, vector<1x128xf32>
    %c0_154 = arith.constant 0 : index
    %c0_155 = arith.constant 0 : index
    %422 = vector.load %arg5[%c0_154, %c0_155] : memref<1x128xf32, #tpu.memory_space<vmem>>, vector<1x128xf32>
    tpu.vector_store %arg5[%c0_154, %c0_155], %421 {strides = array<i32>} : memref<1x128xf32, #tpu.memory_space<vmem>>, vector<1x128xf32>,
    %c0_156 = arith.constant 0 : index
    %c0_157 = arith.constant 0 : index
    %423 = vector.load %arg5[%c0_156, %c0_157] : memref<1x128xf32, #tpu.memory_space<vmem>>, vector<1x128xf32>
    %424 = vector.broadcast %414 : vector<1x1xi32> to vector<1x128xi32>
    %425 = arith.cmpi eq, %21, %424 : vector<1x128xi32>
    %cst_158 = arith.constant 3.000000e+38 : f32
    %426 = vector.broadcast %cst_158 : f32 to vector<1x128xf32>
    %427 = arith.cmpf oeq, %400, %426 : vector<1x128xf32>
    %428 = arith.ori %427, %425 : vector<1x128xi1>
    %429 = arith.minimumf %400, %423 : vector<1x128xf32>
    %cst_159 = arith.constant 3.000000e+38 : f32
    %430 = vector.broadcast %cst_159 : f32 to vector<1x128xf32>
    %431 = arith.select %428, %430, %429 : vector<1x128xi1>, vector<1x128xf32>
    %c13_i32 = arith.constant 13 : i32
    %432 = vector.shape_cast %431 : vector<1x128xf32> to vector<1x1x128xf32>
    %cst_160 = arith.constant dense<0x7F800000> : vector<1xf32>
    %433 = vector.multi_reduction <minimumf>, %432, %cst_160 [1, 2] : vector<1x1x128xf32> to vector<1xf32>
    %434 = vector.shape_cast %433 : vector<1xf32> to vector<1x1x1xf32>
    %435 = vector.extract %434[0, 0, 0] : f32 from vector<1x1x1xf32>
    %436 = vector.broadcast %435 : f32 to vector<1x1xf32>
    %437 = vector.broadcast %436 : vector<1x1xf32> to vector<1x128xf32>
    %438 = arith.cmpf oeq, %431, %437 : vector<1x128xf32>
    %c128_i32_161 = arith.constant 128 : i32
    %439 = vector.broadcast %c128_i32_161 : i32 to vector<1x128xi32>
    %440 = arith.select %438, %21, %439 : vector<1x128xi1>, vector<1x128xi32>
    %441 = vector.shape_cast %440 : vector<1x128xi32> to vector<1x1x128xi32>
    %cst_162 = arith.constant dense<2147483647> : vector<1xi32>
    %442 = vector.multi_reduction <minsi>, %441, %cst_162 [1, 2] : vector<1x1x128xi32> to vector<1xi32>
    %443 = vector.shape_cast %442 : vector<1xi32> to vector<1x1x1xi32>
    %444 = vector.extract %443[0, 0, 0] : i32 from vector<1x1x1xi32>
    %445 = vector.broadcast %444 : i32 to vector<1x1xi32>
    %446 = vector.shape_cast %436 : vector<1x1xf32> to vector<1x1xf32>
    %447 = vector.broadcast %446 : vector<1x1xf32> to vector<1x128xf32>
    %448 = arith.index_cast %c13_i32 : i32 to index
    %c0_163 = arith.constant 0 : index
    %449 = vector.load %arg3[%448, %c0_163] : memref<16x128xf32, #tpu.memory_space<vmem>>, vector<1x128xf32>
    tpu.vector_store %arg3[%448, %c0_163], %447 {strides = array<i32>} : memref<16x128xf32, #tpu.memory_space<vmem>>, vector<1x128xf32>,
    %450 = vector.extract %445[0, 0] : i32 from vector<1x1xi32>
    %451 = arith.index_cast %450 : i32 to index
    %c0_164 = arith.constant 0 : index
    %452 = vector.load %arg4[%451, %c0_164] : memref<128x128xf32, #tpu.memory_space<vmem>>, vector<1x128xf32>
    %c0_165 = arith.constant 0 : index
    %c0_166 = arith.constant 0 : index
    %453 = vector.load %arg5[%c0_165, %c0_166] : memref<1x128xf32, #tpu.memory_space<vmem>>, vector<1x128xf32>
    tpu.vector_store %arg5[%c0_165, %c0_166], %452 {strides = array<i32>} : memref<1x128xf32, #tpu.memory_space<vmem>>, vector<1x128xf32>,
    %c0_167 = arith.constant 0 : index
    %c0_168 = arith.constant 0 : index
    %454 = vector.load %arg5[%c0_167, %c0_168] : memref<1x128xf32, #tpu.memory_space<vmem>>, vector<1x128xf32>
    %455 = vector.broadcast %445 : vector<1x1xi32> to vector<1x128xi32>
    %456 = arith.cmpi eq, %21, %455 : vector<1x128xi32>
    %cst_169 = arith.constant 3.000000e+38 : f32
    %457 = vector.broadcast %cst_169 : f32 to vector<1x128xf32>
    %458 = arith.cmpf oeq, %431, %457 : vector<1x128xf32>
    %459 = arith.ori %458, %456 : vector<1x128xi1>
    %460 = arith.minimumf %431, %454 : vector<1x128xf32>
    %cst_170 = arith.constant 3.000000e+38 : f32
    %461 = vector.broadcast %cst_170 : f32 to vector<1x128xf32>
    %462 = arith.select %459, %461, %460 : vector<1x128xi1>, vector<1x128xf32>
    %c14_i32 = arith.constant 14 : i32
    %463 = vector.shape_cast %462 : vector<1x128xf32> to vector<1x1x128xf32>
    %cst_171 = arith.constant dense<0x7F800000> : vector<1xf32>
    %464 = vector.multi_reduction <minimumf>, %463, %cst_171 [1, 2] : vector<1x1x128xf32> to vector<1xf32>
    %465 = vector.shape_cast %464 : vector<1xf32> to vector<1x1x1xf32>
    %466 = vector.extract %465[0, 0, 0] : f32 from vector<1x1x1xf32>
    %467 = vector.broadcast %466 : f32 to vector<1x1xf32>
    %468 = vector.broadcast %467 : vector<1x1xf32> to vector<1x128xf32>
    %469 = arith.cmpf oeq, %462, %468 : vector<1x128xf32>
    %c128_i32_172 = arith.constant 128 : i32
    %470 = vector.broadcast %c128_i32_172 : i32 to vector<1x128xi32>
    %471 = arith.select %469, %21, %470 : vector<1x128xi1>, vector<1x128xi32>
    %472 = vector.shape_cast %471 : vector<1x128xi32> to vector<1x1x128xi32>
    %cst_173 = arith.constant dense<2147483647> : vector<1xi32>
    %473 = vector.multi_reduction <minsi>, %472, %cst_173 [1, 2] : vector<1x1x128xi32> to vector<1xi32>
    %474 = vector.shape_cast %473 : vector<1xi32> to vector<1x1x1xi32>
    %475 = vector.extract %474[0, 0, 0] : i32 from vector<1x1x1xi32>
    %476 = vector.broadcast %475 : i32 to vector<1x1xi32>
    %477 = vector.shape_cast %467 : vector<1x1xf32> to vector<1x1xf32>
    %478 = vector.broadcast %477 : vector<1x1xf32> to vector<1x128xf32>
    %479 = arith.index_cast %c14_i32 : i32 to index
    %c0_174 = arith.constant 0 : index
    %480 = vector.load %arg3[%479, %c0_174] : memref<16x128xf32, #tpu.memory_space<vmem>>, vector<1x128xf32>
    tpu.vector_store %arg3[%479, %c0_174], %478 {strides = array<i32>} : memref<16x128xf32, #tpu.memory_space<vmem>>, vector<1x128xf32>,
    %481 = vector.extract %476[0, 0] : i32 from vector<1x1xi32>
    %482 = arith.index_cast %481 : i32 to index
    %c0_175 = arith.constant 0 : index
    %483 = vector.load %arg4[%482, %c0_175] : memref<128x128xf32, #tpu.memory_space<vmem>>, vector<1x128xf32>
    %c0_176 = arith.constant 0 : index
    %c0_177 = arith.constant 0 : index
    %484 = vector.load %arg5[%c0_176, %c0_177] : memref<1x128xf32, #tpu.memory_space<vmem>>, vector<1x128xf32>
    tpu.vector_store %arg5[%c0_176, %c0_177], %483 {strides = array<i32>} : memref<1x128xf32, #tpu.memory_space<vmem>>, vector<1x128xf32>,
    %c0_178 = arith.constant 0 : index
    %c0_179 = arith.constant 0 : index
    %485 = vector.load %arg5[%c0_178, %c0_179] : memref<1x128xf32, #tpu.memory_space<vmem>>, vector<1x128xf32>
    %486 = vector.broadcast %476 : vector<1x1xi32> to vector<1x128xi32>
    %487 = arith.cmpi eq, %21, %486 : vector<1x128xi32>
    %cst_180 = arith.constant 3.000000e+38 : f32
    %488 = vector.broadcast %cst_180 : f32 to vector<1x128xf32>
    %489 = arith.cmpf oeq, %462, %488 : vector<1x128xf32>
    %490 = arith.ori %489, %487 : vector<1x128xi1>
    %491 = arith.minimumf %462, %485 : vector<1x128xf32>
    %cst_181 = arith.constant 3.000000e+38 : f32
    %492 = vector.broadcast %cst_181 : f32 to vector<1x128xf32>
    %493 = arith.select %490, %492, %491 : vector<1x128xi1>, vector<1x128xf32>
    %c15_i32 = arith.constant 15 : i32
    return
  }
  func.func @transform_0(%arg0: i32) -> (i32, i32) {
    %c0_i32 = arith.constant 0 : i32
    %c0_i32_0 = arith.constant 0 : i32
    %c0_i32_1 = arith.constant 0 : i32
    return %c0_i32, %c0_i32_0 : i32, i32
  }
  func.func @transform_1(%arg0: i32) -> (i32, i32) {
    %c0_i32 = arith.constant 0 : i32
    %c0_i32_0 = arith.constant 0 : i32
    %c0_i32_1 = arith.constant 0 : i32
    return %c0_i32, %c0_i32_0 : i32, i32
  }
  func.func @transform_2(%arg0: i32) -> (i32, i32) {
    %c0_i32 = arith.constant 0 : i32
    %c0_i32_0 = arith.constant 0 : i32
    %c0_i32_1 = arith.constant 0 : i32
    return %c0_i32, %c0_i32_0 : i32, i32
  }
}

</mosaic_0001>

<llo_original>
// kernel: tpu_custom_call.1
$region0: #{tpu_custom_call.1}
  #allocation0 [shape = 'u32[]', space=smem, size = 0x4, offset = 0x4, fixed_abs, tag = 'smem constant byte address 0x4 - core index']
  #allocation1 [shape = 'u32[72,128]{1,0:T(1,128)}', space=vmem, size = 0x9000, scoped, tag = 'internal scratch']
  #allocation2 [shape = 'f32[128,128]{1,0:T(8,128)}', space=vmem, size = 0x10000, scoped, tag = 'scratch operand']
  #allocation3 [shape = 'f32[1,128]{1,0:T(1,128)}', space=vmem, size = 0x200, scoped, tag = 'scratch operand']
  %s0 = inlined_call_operand.vmem [shape: f32[128,10], index: 0, kind: input, shape index: {}]
  %s1 = inlined_call_operand.vmem [shape: f32[128,10], index: 1, kind: input, shape index: {}]
  %s2 = inlined_call_operand.hbm [shape: f32[16,128], index: 2, kind: output, shape index: {}]
  %s3 = sld [smem:[#allocation0]]
  $region18: #{tpu_custom_call.1} parent=0
    _
  %s5 = ssub.s32 1, %s3
  %s6 = scalar_select 0, %s5, %s3
  $region1: #{tpu_custom_call.1} parent=0
    #allocation4 [shape = 'u8[8192]{0}', space=vmem, size = 0x2000, scoped, tag = 'output window, operand 0, single buffered']
    #allocation5 [shape = 's32[1]{0}', space=sflag, size = 0x4, scoped, tag = 'scoped memory for tpu_custom_call.1']
    %7 = vsyncpa [#allocation5], 0
    // Predicated region
    $region2: #{tpu_custom_call.1} parent=1 // pred_check
      _
    $region3: #{tpu_custom_call.1} parent=1 // pred_check_branch
      %9 = sbr.rel (0) target = $region5
    $region4: #{tpu_custom_call.1} parent=1 // pred_region
      _
    $region5: #{tpu_custom_call.1} parent=1 // pred_fallthru
      _
    // Predicated region
    $region6: #{tpu_custom_call.1} parent=1 // pred_check
      _
    $region7: #{tpu_custom_call.1} parent=1 // pred_check_branch
      %11 = sbr.rel (0) target = $region9
    $region8: #{tpu_custom_call.1} parent=1 // pred_region
      _
    $region9: #{tpu_custom_call.1} parent=1 // pred_fallthru
      _
    %v12 = vld [vmem:[%s0] sm:$0xff]
    %v13 = vld [vmem:[%s0 + $0x8] sm:$0xff]
    %v14 = vld [vmem:[%s0 + $0x10] sm:$0xff]
    %v15 = vld [vmem:[%s0 + $0x18] sm:$0xff]
    %v16 = vld [vmem:[%s0 + $0x20] sm:$0xff]
    %v17 = vld [vmem:[%s0 + $0x28] sm:$0xff]
    %v18 = vld [vmem:[%s0 + $0x30] sm:$0xff]
    %v19 = vld [vmem:[%s0 + $0x38] sm:$0xff]
    %v20 = vld [vmem:[%s0 + $0x40] sm:$0xff]
    %v21 = vld [vmem:[%s0 + $0x48] sm:$0xff]
    %v22 = vld [vmem:[%s0 + $0x50] sm:$0xff]
    %v23 = vld [vmem:[%s0 + $0x58] sm:$0xff]
    %v24 = vld [vmem:[%s0 + $0x60] sm:$0xff]
    %v25 = vld [vmem:[%s0 + $0x68] sm:$0xff]
    %v26 = vld [vmem:[%s0 + $0x70] sm:$0xff]
    %v27 = vld [vmem:[%s0 + $0x78] sm:$0xff]
    %v28 = vld [vmem:[%s1] sm:$0xff]
    %v29 = vld [vmem:[%s1 + $0x8] sm:$0xff]
    %v30 = vld [vmem:[%s1 + $0x10] sm:$0xff]
    %v31 = vld [vmem:[%s1 + $0x18] sm:$0xff]
    %v32 = vld [vmem:[%s1 + $0x20] sm:$0xff]
    %v33 = vld [vmem:[%s1 + $0x28] sm:$0xff]
    %v34 = vld [vmem:[%s1 + $0x30] sm:$0xff]
    %v35 = vld [vmem:[%s1 + $0x38] sm:$0xff]
    %v36 = vld [vmem:[%s1 + $0x40] sm:$0xff]
    %v37 = vld [vmem:[%s1 + $0x48] sm:$0xff]
    %v38 = vld [vmem:[%s1 + $0x50] sm:$0xff]
    %v39 = vld [vmem:[%s1 + $0x58] sm:$0xff]
    %v40 = vld [vmem:[%s1 + $0x60] sm:$0xff]
    %v41 = vld [vmem:[%s1 + $0x68] sm:$0xff]
    %v42 = vld [vmem:[%s1 + $0x70] sm:$0xff]
    %v43 = vld [vmem:[%s1 + $0x78] sm:$0xff]
    %vm44 = vcmask 80896
    %v46 = vsel %vm44, %v12, 0
    %v49 = vsel %vm44, %v13, 0
    %v52 = vsel %vm44, %v14, 0
    %v55 = vsel %vm44, %v15, 0
    %v58 = vsel %vm44, %v16, 0
    %v61 = vsel %vm44, %v17, 0
    %v64 = vsel %vm44, %v18, 0
    %v67 = vsel %vm44, %v19, 0
    %v70 = vsel %vm44, %v20, 0
    %v73 = vsel %vm44, %v21, 0
    %v76 = vsel %vm44, %v22, 0
    %v79 = vsel %vm44, %v23, 0
    %v82 = vsel %vm44, %v24, 0
    %v85 = vsel %vm44, %v25, 0
    %v88 = vsel %vm44, %v26, 0
    %v91 = vsel %vm44, %v27, 0
    %v94 = vsel %vm44, %v28, 0
    %v97 = vsel %vm44, %v29, 0
    %v100 = vsel %vm44, %v30, 0
    %v103 = vsel %vm44, %v31, 0
    %v106 = vsel %vm44, %v32, 0
    %v109 = vsel %vm44, %v33, 0
    %v112 = vsel %vm44, %v34, 0
    %v115 = vsel %vm44, %v35, 0
    %v118 = vsel %vm44, %v36, 0
    %v121 = vsel %vm44, %v37, 0
    %v124 = vsel %vm44, %v38, 0
    %v127 = vsel %vm44, %v39, 0
    %v130 = vsel %vm44, %v40, 0
    %v133 = vsel %vm44, %v41, 0
    %v136 = vsel %vm44, %v42, 0
    %v139 = vsel %vm44, %v43, 0
    %141 = vmatpush.xpose.msra.mxu0 %v139
    %142 = vmatpush.xpose.msra.mxu0 %v136
    %143 = vmatpush.xpose.msra.mxu0 %v133
    %144 = vmatpush.xpose.msra.mxu0 %v130
    %145 = vmatpush.xpose.msra.mxu0 %v127
    %146 = vmatpush.xpose.msra.mxu0 %v124
    %147 = vmatpush.xpose.msra.mxu0 %v121
    %148 = vmatpush.xpose.msra.mxu0 %v118
    %149 = vmatpush.xpose.msra.mxu0 %v115
    %150 = vmatpush.xpose.msra.mxu0 %v112
    %151 = vmatpush.xpose.msra.mxu0 %v109
    %152 = vmatpush.xpose.msra.mxu0 %v106
    %153 = vmatpush.xpose.msra.mxu0 %v103
    %154 = vmatpush.xpose.msra.mxu0 %v100
    %155 = vmatpush.xpose.msra.mxu0 %v97
    %156 = vmatpush.xpose.msra.mxu0 %v94
    %157 = vmatmul.f32.gmra.mxu0 %v46
    %v158 = vpop.f32.mrf.mxu0
    %v159 = vadd.f32 0.0, %v158
    %160 = vmatmul.f32.gmra.mxu0 %v49
    %v161 = vpop.f32.mrf.mxu0
    %v162 = vadd.f32 0.0, %v161
    %163 = vmatmul.f32.gmra.mxu0 %v52
    %v164 = vpop.f32.mrf.mxu0
    %v165 = vadd.f32 0.0, %v164
    %166 = vmatmul.f32.gmra.mxu0 %v55
    %v167 = vpop.f32.mrf.mxu0
    %v168 = vadd.f32 0.0, %v167
    %169 = vmatmul.f32.gmra.mxu0 %v58
    %v170 = vpop.f32.mrf.mxu0
    %v171 = vadd.f32 0.0, %v170
    %172 = vmatmul.f32.gmra.mxu0 %v61
    %v173 = vpop.f32.mrf.mxu0
    %v174 = vadd.f32 0.0, %v173
    %175 = vmatmul.f32.gmra.mxu0 %v64
    %v176 = vpop.f32.mrf.mxu0
    %v177 = vadd.f32 0.0, %v176
    %178 = vmatmul.f32.gmra.mxu0 %v67
    %v179 = vpop.f32.mrf.mxu0
    %v180 = vadd.f32 0.0, %v179
    %181 = vmatmul.f32.gmra.mxu0 %v70
    %v182 = vpop.f32.mrf.mxu0
    %v183 = vadd.f32 0.0, %v182
    %184 = vmatmul.f32.gmra.mxu0 %v73
    %v185 = vpop.f32.mrf.mxu0
    %v186 = vadd.f32 0.0, %v185
    %187 = vmatmul.f32.gmra.mxu0 %v76
    %v188 = vpop.f32.mrf.mxu0
    %v189 = vadd.f32 0.0, %v188
    %190 = vmatmul.f32.gmra.mxu0 %v79
    %v191 = vpop.f32.mrf.mxu0
    %v192 = vadd.f32 0.0, %v191
    %193 = vmatmul.f32.gmra.mxu0 %v82
    %v194 = vpop.f32.mrf.mxu0
    %v195 = vadd.f32 0.0, %v194
    %196 = vmatmul.f32.gmra.mxu0 %v85
    %v197 = vpop.f32.mrf.mxu0
    %v198 = vadd.f32 0.0, %v197
    %199 = vmatmul.f32.gmra.mxu0 %v88
    %v200 = vpop.f32.mrf.mxu0
    %v201 = vadd.f32 0.0, %v200
    %202 = vmatmul.f32.gmra.mxu0 %v91
    %v203 = vpop.f32.mrf.mxu0
    %v204 = vadd.f32 0.0, %v203
    %205 = vdwg.mxu0
    %v206 = vlaneseq
    %v207 = vand.u32 %v206, 127
    %vm208 = vcmp.ge.s32.totalorder %v207, 16
    %v209 = vmax.f32 %v159, 0.0
    %v210 = vmax.f32 %v162, 0.0
    %v211 = vmax.f32 %v165, 0.0
    %v212 = vmax.f32 %v168, 0.0
    %v213 = vmax.f32 %v171, 0.0
    %v214 = vmax.f32 %v174, 0.0
    %v215 = vmax.f32 %v177, 0.0
    %v216 = vmax.f32 %v180, 0.0
    %v217 = vmax.f32 %v183, 0.0
    %v218 = vmax.f32 %v186, 0.0
    %v219 = vmax.f32 %v189, 0.0
    %v220 = vmax.f32 %v192, 0.0
    %v221 = vmax.f32 %v195, 0.0
    %v222 = vmax.f32 %v198, 0.0
    %v223 = vmax.f32 %v201, 0.0
    %v224 = vmax.f32 %v204, 0.0
    %v225 = vsel %vm208, 1, 0
    %vm226 = vcmp.eq.s32.totalorder %v225, 1
    %v227 = vsel %vm226, 3e+38, %v209
    %v228 = vsel %vm226, 3e+38, %v210
    %v229 = vsel %vm226, 3e+38, %v211
    %v230 = vsel %vm226, 3e+38, %v212
    %v231 = vsel %vm226, 3e+38, %v213
    %v232 = vsel %vm226, 3e+38, %v214
    %v233 = vsel %vm226, 3e+38, %v215
    %v234 = vsel %vm226, 3e+38, %v216
    %v235 = vsel %vm226, 3e+38, %v217
    %v236 = vsel %vm226, 3e+38, %v218
    %v237 = vsel %vm226, 3e+38, %v219
    %v238 = vsel %vm226, 3e+38, %v220
    %v239 = vsel %vm226, 3e+38, %v221
    %v240 = vsel %vm226, 3e+38, %v222
    %v241 = vsel %vm226, 3e+38, %v223
    %v242 = vsel %vm226, 3e+38, %v224
    %243 = vst [vmem:[#allocation2] sm:$0xff] %v227
    %244 = vst [vmem:[#allocation2 + $0x8] sm:$0xff] %v228
    %245 = vst [vmem:[#allocation2 + $0x10] sm:$0xff] %v229
    %246 = vst [vmem:[#allocation2 + $0x18] sm:$0xff] %v230
    %247 = vst [vmem:[#allocation2 + $0x20] sm:$0xff] %v231
    %248 = vst [vmem:[#allocation2 + $0x28] sm:$0xff] %v232
    %249 = vst [vmem:[#allocation2 + $0x30] sm:$0xff] %v233
    %250 = vst [vmem:[#allocation2 + $0x38] sm:$0xff] %v234
    %251 = vst [vmem:[#allocation2 + $0x40] sm:$0xff] %v235
    %252 = vst [vmem:[#allocation2 + $0x48] sm:$0xff] %v236
    %253 = vst [vmem:[#allocation2 + $0x50] sm:$0xff] %v237
    %254 = vst [vmem:[#allocation2 + $0x58] sm:$0xff] %v238
    %255 = vst [vmem:[#allocation2 + $0x60] sm:$0xff] %v239
    %256 = vst [vmem:[#allocation2 + $0x68] sm:$0xff] %v240
    %257 = vst [vmem:[#allocation2 + $0x70] sm:$0xff] %v241
    %258 = vst [vmem:[#allocation2 + $0x78] sm:$0xff] %v242
    %259 = vst [vmem:[#allocation3] sm:$0x1] %v227
    %v260 = vlaneseq
    %v261 = vshrl.u32 %v260, 7
    %v262 = vmul.u32 %v261, 128
    %v263 = vadd.s32 %v262, %v207
    %vm264 = vcmp.eq.s32.totalorder %v263, 0
    %v265 = vld [vmem:[#allocation3] sm:$0x1]
    %v266 = vsel %vm264, 3e+38, %v265
    %267 = vst [vmem:[#allocation4] sm:$0xff] 0.0
    %268 = vst [vmem:[#allocation4 + $0x8] sm:$0xff] 0.0
    %vm269 = vcmask 1040384
    %v270 = vsel %vm269, %v266, inf
    %271 = vmin.xlane.f32.xlu0 %v270
    %v272 = vpop.xlane.xlu0 %271
    %v273 = vrot.slane %v272, 4
    %v274 = vmin.f32 %v272, %v273
    %v275 = vrot.slane %v274, 2
    %v276 = vmin.f32 %v274, %v275
    %v277 = vrot.slane %v276, 1
    %v278 = vmin.f32 %v276, %v277
    %s279 = vtos %v278
    %v280 = vstv %s279
    %vm281 = vcmp.eq.f32.partialorder %v266, %v280
    %v282 = vsel %vm281, %v263, 128
    %v283 = vsel %vm269, %v282, 2147483647
    %v284 = vand.u32 %v283, 65535
    %v285 = vshra.s32 %v283, 16
    %v286 = vcvt.s32.f32 %v284
    %v287 = vcvt.s32.f32 %v285
    %288 = vmin.xlane.f32.xlu0 %v287
    %v289 = vpop.xlane.xlu0 %288
    %vm290 = vcmp.eq.f32.partialorder %v287, %v289
    %v291 = vsel %vm290, %v286, inf
    %292 = vmin.xlane.f32.xlu0 %v291
    %v293 = vpop.xlane.xlu0 %292
    %v294 = vcvt.f32.s32 %v293
    %v295 = vcvt.f32.s32 %v289
    %v296 = vshll.u32 %v295, 16
    %v297 = vadd.s32 %v296, %v294
    %v298 = vrot.slane %v297, 4
    %vm299 = vcmp.lt.s32.totalorder %v297, %v298
    %v300 = vsel %vm299, %v297, %v298
    %v301 = vrot.slane %v300, 2
    %vm302 = vcmp.lt.s32.totalorder %v300, %v301
    %v303 = vsel %vm302, %v300, %v301
    %v304 = vrot.slane %v303, 1
    %vm305 = vcmp.lt.s32.totalorder %v303, %v304
    %v306 = vsel %vm305, %v303, %v304
    %s307 = vtos %v306
    %308 = vst [vmem:[#allocation4] sm:$0x1] %v280
    %s309 = scalar_lea.vmem [#allocation2], %s307
    %v310 = vld [vmem:[%s309] sm:$0x1]
    %311 = vst [vmem:[#allocation3] sm:$0x1] %v310
    %v312 = vld [vmem:[#allocation3] sm:$0x1]
    %v313 = vstv %s307
    %vm314 = vcmp.eq.s32.totalorder %v263, %v313
    %vm315 = vcmp.eq.f32.partialorder %v266, 3e+38
    %vm316 = vmor %vm315, %vm314
    %v317 = vmin.f32 %v266, %v312
    %v318 = vsel %vm316, 3e+38, %v317
    %v319 = vsel %vm269, %v318, inf
    %320 = vmin.xlane.f32.xlu0 %v319
    %v321 = vpop.xlane.xlu0 %320
    %v322 = vrot.slane %v321, 4
    %v323 = vmin.f32 %v321, %v322
    %v324 = vrot.slane %v323, 2
    %v325 = vmin.f32 %v323, %v324
    %v326 = vrot.slane %v325, 1
    %v327 = vmin.f32 %v325, %v326
    %s328 = vtos %v327
    %v329 = vstv %s328
    %vm330 = vcmp.eq.f32.partialorder %v318, %v329
    %v331 = vsel %vm330, %v263, 128
    %v332 = vsel %vm269, %v331, 2147483647
    %v333 = vand.u32 %v332, 65535
    %v334 = vshra.s32 %v332, 16
    %v335 = vcvt.s32.f32 %v333
    %v336 = vcvt.s32.f32 %v334
    %337 = vmin.xlane.f32.xlu0 %v336
    %v338 = vpop.xlane.xlu0 %337
    %vm339 = vcmp.eq.f32.partialorder %v336, %v338
    %v340 = vsel %vm339, %v335, inf
    %341 = vmin.xlane.f32.xlu0 %v340
    %v342 = vpop.xlane.xlu0 %341
    %v343 = vcvt.f32.s32 %v342
    %v344 = vcvt.f32.s32 %v338
    %v345 = vshll.u32 %v344, 16
    %v346 = vadd.s32 %v345, %v343
    %v347 = vrot.slane %v346, 4
    %vm348 = vcmp.lt.s32.totalorder %v346, %v347
    %v349 = vsel %vm348, %v346, %v347
    %v350 = vrot.slane %v349, 2
    %vm351 = vcmp.lt.s32.totalorder %v349, %v350
    %v352 = vsel %vm351, %v349, %v350
    %v353 = vrot.slane %v352, 1
    %vm354 = vcmp.lt.s32.totalorder %v352, %v353
    %v355 = vsel %vm354, %v352, %v353
    %s356 = vtos %v355
    %357 = vst [vmem:[#allocation4 + $0x1] sm:$0x1] %v329
    %s358 = scalar_lea.vmem [#allocation2], %s356
    %v359 = vld [vmem:[%s358] sm:$0x1]
    %360 = vst [vmem:[#allocation3] sm:$0x1] %v359
    %v361 = vld [vmem:[#allocation3] sm:$0x1]
    %v362 = vstv %s356
    %vm363 = vcmp.eq.s32.totalorder %v263, %v362
    %vm364 = vcmp.eq.f32.partialorder %v318, 3e+38
    %vm365 = vmor %vm364, %vm363
    %v366 = vmin.f32 %v318, %v361
    %v367 = vsel %vm365, 3e+38, %v366
    %v368 = vsel %vm269, %v367, inf
    %369 = vmin.xlane.f32.xlu0 %v368
    %v370 = vpop.xlane.xlu0 %369
    %v371 = vrot.slane %v370, 4
    %v372 = vmin.f32 %v370, %v371
    %v373 = vrot.slane %v372, 2
    %v374 = vmin.f32 %v372, %v373
    %v375 = vrot.slane %v374, 1
    %v376 = vmin.f32 %v374, %v375
    %s377 = vtos %v376
    %v378 = vstv %s377
    %vm379 = vcmp.eq.f32.partialorder %v367, %v378
    %v380 = vsel %vm379, %v263, 128
    %v381 = vsel %vm269, %v380, 2147483647
    %v382 = vand.u32 %v381, 65535
    %v383 = vshra.s32 %v381, 16
    %v384 = vcvt.s32.f32 %v382
    %v385 = vcvt.s32.f32 %v383
    %386 = vmin.xlane.f32.xlu0 %v385
    %v387 = vpop.xlane.xlu0 %386
    %vm388 = vcmp.eq.f32.partialorder %v385, %v387
    %v389 = vsel %vm388, %v384, inf
    %390 = vmin.xlane.f32.xlu0 %v389
    %v391 = vpop.xlane.xlu0 %390
    %v392 = vcvt.f32.s32 %v391
    %v393 = vcvt.f32.s32 %v387
    %v394 = vshll.u32 %v393, 16
    %v395 = vadd.s32 %v394, %v392
    %v396 = vrot.slane %v395, 4
    %vm397 = vcmp.lt.s32.totalorder %v395, %v396
    %v398 = vsel %vm397, %v395, %v396
    %v399 = vrot.slane %v398, 2
    %vm400 = vcmp.lt.s32.totalorder %v398, %v399
    %v401 = vsel %vm400, %v398, %v399
    %v402 = vrot.slane %v401, 1
    %vm403 = vcmp.lt.s32.totalorder %v401, %v402
    %v404 = vsel %vm403, %v401, %v402
    %s405 = vtos %v404
    %406 = vst [vmem:[#allocation4 + $0x2] sm:$0x1] %v378
    %s407 = scalar_lea.vmem [#allocation2], %s405
    %v408 = vld [vmem:[%s407] sm:$0x1]
    %409 = vst [vmem:[#allocation3] sm:$0x1] %v408
    %v410 = vld [vmem:[#allocation3] sm:$0x1]
    %v411 = vstv %s405
    %vm412 = vcmp.eq.s32.totalorder %v263, %v411
    %vm413 = vcmp.eq.f32.partialorder %v367, 3e+38
    %vm414 = vmor %vm413, %vm412
    %v415 = vmin.f32 %v367, %v410
    %v416 = vsel %vm414, 3e+38, %v415
    %v417 = vsel %vm269, %v416, inf
    %418 = vmin.xlane.f32.xlu0 %v417
    %v419 = vpop.xlane.xlu0 %418
    %v420 = vrot.slane %v419, 4
    %v421 = vmin.f32 %v419, %v420
    %v422 = vrot.slane %v421, 2
    %v423 = vmin.f32 %v421, %v422
    %v424 = vrot.slane %v423, 1
    %v425 = vmin.f32 %v423, %v424
    %s426 = vtos %v425
    %v427 = vstv %s426
    %vm428 = vcmp.eq.f32.partialorder %v416, %v427
    %v429 = vsel %vm428, %v263, 128
    %v430 = vsel %vm269, %v429, 2147483647
    %v431 = vand.u32 %v430, 65535
    %v432 = vshra.s32 %v430, 16
    %v433 = vcvt.s32.f32 %v431
    %v434 = vcvt.s32.f32 %v432
    %435 = vmin.xlane.f32.xlu0 %v434
    %v436 = vpop.xlane.xlu0 %435
    %vm437 = vcmp.eq.f32.partialorder %v434, %v436
    %v438 = vsel %vm437, %v433, inf
    %439 = vmin.xlane.f32.xlu0 %v438
    %v440 = vpop.xlane.xlu0 %439
    %v441 = vcvt.f32.s32 %v440
    %v442 = vcvt.f32.s32 %v436
    %v443 = vshll.u32 %v442, 16
    %v444 = vadd.s32 %v443, %v441
    %v445 = vrot.slane %v444, 4
    %vm446 = vcmp.lt.s32.totalorder %v444, %v445
    %v447 = vsel %vm446, %v444, %v445
    %v448 = vrot.slane %v447, 2
    %vm449 = vcmp.lt.s32.totalorder %v447, %v448
    %v450 = vsel %vm449, %v447, %v448
    %v451 = vrot.slane %v450, 1
    %vm452 = vcmp.lt.s32.totalorder %v450, %v451
    %v453 = vsel %vm452, %v450, %v451
    %s454 = vtos %v453
    %455 = vst [vmem:[#allocation4 + $0x3] sm:$0x1] %v427
    %s456 = scalar_lea.vmem [#allocation2], %s454
    %v457 = vld [vmem:[%s456] sm:$0x1]
    %458 = vst [vmem:[#allocation3] sm:$0x1] %v457
    %v459 = vld [vmem:[#allocation3] sm:$0x1]
    %v460 = vstv %s454
    %vm461 = vcmp.eq.s32.totalorder %v263, %v460
    %vm462 = vcmp.eq.f32.partialorder %v416, 3e+38
    %vm463 = vmor %vm462, %vm461
    %v464 = vmin.f32 %v416, %v459
    %v465 = vsel %vm463, 3e+38, %v464
    %v466 = vsel %vm269, %v465, inf
    %467 = vmin.xlane.f32.xlu0 %v466
    %v468 = vpop.xlane.xlu0 %467
    %v469 = vrot.slane %v468, 4
    %v470 = vmin.f32 %v468, %v469
    %v471 = vrot.slane %v470, 2
    %v472 = vmin.f32 %v470, %v471
    %v473 = vrot.slane %v472, 1
    %v474 = vmin.f32 %v472, %v473
    %s475 = vtos %v474
    %v476 = vstv %s475
    %vm477 = vcmp.eq.f32.partialorder %v465, %v476
    %v478 = vsel %vm477, %v263, 128
    %v479 = vsel %vm269, %v478, 2147483647
    %v480 = vand.u32 %v479, 65535
    %v481 = vshra.s32 %v479, 16
    %v482 = vcvt.s32.f32 %v480
    %v483 = vcvt.s32.f32 %v481
    %484 = vmin.xlane.f32.xlu0 %v483
    %v485 = vpop.xlane.xlu0 %484
    %vm486 = vcmp.eq.f32.partialorder %v483, %v485
    %v487 = vsel %vm486, %v482, inf
    %488 = vmin.xlane.f32.xlu0 %v487
    %v489 = vpop.xlane.xlu0 %488
    %v490 = vcvt.f32.s32 %v489
    %v491 = vcvt.f32.s32 %v485
    %v492 = vshll.u32 %v491, 16
    %v493 = vadd.s32 %v492, %v490
    %v494 = vrot.slane %v493, 4
    %vm495 = vcmp.lt.s32.totalorder %v493, %v494
    %v496 = vsel %vm495, %v493, %v494
    %v497 = vrot.slane %v496, 2
    %vm498 = vcmp.lt.s32.totalorder %v496, %v497
    %v499 = vsel %vm498, %v496, %v497
    %v500 = vrot.slane %v499, 1
    %vm501 = vcmp.lt.s32.totalorder %v499, %v500
    %v502 = vsel %vm501, %v499, %v500
    %s503 = vtos %v502
    %504 = vst [vmem:[#allocation4 + $0x4] sm:$0x1] %v476
    %s505 = scalar_lea.vmem [#allocation2], %s503
    %v506 = vld [vmem:[%s505] sm:$0x1]
    %507 = vst [vmem:[#allocation3] sm:$0x1] %v506
    %v508 = vld [vmem:[#allocation3] sm:$0x1]
    %v509 = vstv %s503
    %vm510 = vcmp.eq.s32.totalorder %v263, %v509
    %vm511 = vcmp.eq.f32.partialorder %v465, 3e+38
    %vm512 = vmor %vm511, %vm510
    %v513 = vmin.f32 %v465, %v508
    %v514 = vsel %vm512, 3e+38, %v513
    %v515 = vsel %vm269, %v514, inf
    %516 = vmin.xlane.f32.xlu0 %v515
    %v517 = vpop.xlane.xlu0 %516
    %v518 = vrot.slane %v517, 4
    %v519 = vmin.f32 %v517, %v518
    %v520 = vrot.slane %v519, 2
    %v521 = vmin.f32 %v519, %v520
    %v522 = vrot.slane %v521, 1
    %v523 = vmin.f32 %v521, %v522
    %s524 = vtos %v523
    %v525 = vstv %s524
    %vm526 = vcmp.eq.f32.partialorder %v514, %v525
    %v527 = vsel %vm526, %v263, 128
    %v528 = vsel %vm269, %v527, 2147483647
    %v529 = vand.u32 %v528, 65535
    %v530 = vshra.s32 %v528, 16
    %v531 = vcvt.s32.f32 %v529
    %v532 = vcvt.s32.f32 %v530
    %533 = vmin.xlane.f32.xlu0 %v532
    %v534 = vpop.xlane.xlu0 %533
    %vm535 = vcmp.eq.f32.partialorder %v532, %v534
    %v536 = vsel %vm535, %v531, inf
    %537 = vmin.xlane.f32.xlu0 %v536
    %v538 = vpop.xlane.xlu0 %537
    %v539 = vcvt.f32.s32 %v538
    %v540 = vcvt.f32.s32 %v534
    %v541 = vshll.u32 %v540, 16
    %v542 = vadd.s32 %v541, %v539
    %v543 = vrot.slane %v542, 4
    %vm544 = vcmp.lt.s32.totalorder %v542, %v543
    %v545 = vsel %vm544, %v542, %v543
    %v546 = vrot.slane %v545, 2
    %vm547 = vcmp.lt.s32.totalorder %v545, %v546
    %v548 = vsel %vm547, %v545, %v546
    %v549 = vrot.slane %v548, 1
    %vm550 = vcmp.lt.s32.totalorder %v548, %v549
    %v551 = vsel %vm550, %v548, %v549
    %s552 = vtos %v551
    %553 = vst [vmem:[#allocation4 + $0x5] sm:$0x1] %v525
    %s554 = scalar_lea.vmem [#allocation2], %s552
    %v555 = vld [vmem:[%s554] sm:$0x1]
    %556 = vst [vmem:[#allocation3] sm:$0x1] %v555
    %v557 = vld [vmem:[#allocation3] sm:$0x1]
    %v558 = vstv %s552
    %vm559 = vcmp.eq.s32.totalorder %v263, %v558
    %vm560 = vcmp.eq.f32.partialorder %v514, 3e+38
    %vm561 = vmor %vm560, %vm559
    %v562 = vmin.f32 %v514, %v557
    %v563 = vsel %vm561, 3e+38, %v562
    %v564 = vsel %vm269, %v563, inf
    %565 = vmin.xlane.f32.xlu0 %v564
    %v566 = vpop.xlane.xlu0 %565
    %v567 = vrot.slane %v566, 4
    %v568 = vmin.f32 %v566, %v567
    %v569 = vrot.slane %v568, 2
    %v570 = vmin.f32 %v568, %v569
    %v571 = vrot.slane %v570, 1
    %v572 = vmin.f32 %v570, %v571
    %s573 = vtos %v572
    %v574 = vstv %s573
    %vm575 = vcmp.eq.f32.partialorder %v563, %v574
    %v576 = vsel %vm575, %v263, 128
    %v577 = vsel %vm269, %v576, 2147483647
    %v578 = vand.u32 %v577, 65535
    %v579 = vshra.s32 %v577, 16
    %v580 = vcvt.s32.f32 %v578
    %v581 = vcvt.s32.f32 %v579
    %582 = vmin.xlane.f32.xlu0 %v581
    %v583 = vpop.xlane.xlu0 %582
    %vm584 = vcmp.eq.f32.partialorder %v581, %v583
    %v585 = vsel %vm584, %v580, inf
    %586 = vmin.xlane.f32.xlu0 %v585
    %v587 = vpop.xlane.xlu0 %586
    %v588 = vcvt.f32.s32 %v587
    %v589 = vcvt.f32.s32 %v583
    %v590 = vshll.u32 %v589, 16
    %v591 = vadd.s32 %v590, %v588
    %v592 = vrot.slane %v591, 4
    %vm593 = vcmp.lt.s32.totalorder %v591, %v592
    %v594 = vsel %vm593, %v591, %v592
    %v595 = vrot.slane %v594, 2
    %vm596 = vcmp.lt.s32.totalorder %v594, %v595
    %v597 = vsel %vm596, %v594, %v595
    %v598 = vrot.slane %v597, 1
    %vm599 = vcmp.lt.s32.totalorder %v597, %v598
    %v600 = vsel %vm599, %v597, %v598
    %s601 = vtos %v600
    %602 = vst [vmem:[#allocation4 + $0x6] sm:$0x1] %v574
    %s603 = scalar_lea.vmem [#allocation2], %s601
    %v604 = vld [vmem:[%s603] sm:$0x1]
    %605 = vst [vmem:[#allocation3] sm:$0x1] %v604
    %v606 = vld [vmem:[#allocation3] sm:$0x1]
    %v607 = vstv %s601
    %vm608 = vcmp.eq.s32.totalorder %v263, %v607
    %vm609 = vcmp.eq.f32.partialorder %v563, 3e+38
    %vm610 = vmor %vm609, %vm608
    %v611 = vmin.f32 %v563, %v606
    %v612 = vsel %vm610, 3e+38, %v611
    %v613 = vsel %vm269, %v612, inf
    %614 = vmin.xlane.f32.xlu0 %v613
    %v615 = vpop.xlane.xlu0 %614
    %v616 = vrot.slane %v615, 4
    %v617 = vmin.f32 %v615, %v616
    %v618 = vrot.slane %v617, 2
    %v619 = vmin.f32 %v617, %v618
    %v620 = vrot.slane %v619, 1
    %v621 = vmin.f32 %v619, %v620
    %s622 = vtos %v621
    %v623 = vstv %s622
    %vm624 = vcmp.eq.f32.partialorder %v612, %v623
    %v625 = vsel %vm624, %v263, 128
    %v626 = vsel %vm269, %v625, 2147483647
    %v627 = vand.u32 %v626, 65535
    %v628 = vshra.s32 %v626, 16
    %v629 = vcvt.s32.f32 %v627
    %v630 = vcvt.s32.f32 %v628
    %631 = vmin.xlane.f32.xlu0 %v630
    %v632 = vpop.xlane.xlu0 %631
    %vm633 = vcmp.eq.f32.partialorder %v630, %v632
    %v634 = vsel %vm633, %v629, inf
    %635 = vmin.xlane.f32.xlu0 %v634
    %v636 = vpop.xlane.xlu0 %635
    %v637 = vcvt.f32.s32 %v636
    %v638 = vcvt.f32.s32 %v632
    %v639 = vshll.u32 %v638, 16
    %v640 = vadd.s32 %v639, %v637
    %v641 = vrot.slane %v640, 4
    %vm642 = vcmp.lt.s32.totalorder %v640, %v641
    %v643 = vsel %vm642, %v640, %v641
    %v644 = vrot.slane %v643, 2
    %vm645 = vcmp.lt.s32.totalorder %v643, %v644
    %v646 = vsel %vm645, %v643, %v644
    %v647 = vrot.slane %v646, 1
    %vm648 = vcmp.lt.s32.totalorder %v646, %v647
    %v649 = vsel %vm648, %v646, %v647
    %s650 = vtos %v649
    %651 = vst [vmem:[#allocation4 + $0x7] sm:$0x1] %v623
    %s652 = scalar_lea.vmem [#allocation2], %s650
    %v653 = vld [vmem:[%s652] sm:$0x1]
    %654 = vst [vmem:[#allocation3] sm:$0x1] %v653
    %v655 = vld [vmem:[#allocation3] sm:$0x1]
    %v656 = vstv %s650
    %vm657 = vcmp.eq.s32.totalorder %v263, %v656
    %vm658 = vcmp.eq.f32.partialorder %v612, 3e+38
    %vm659 = vmor %vm658, %vm657
    %v660 = vmin.f32 %v612, %v655
    %v661 = vsel %vm659, 3e+38, %v660
    %v662 = vsel %vm269, %v661, inf
    %663 = vmin.xlane.f32.xlu0 %v662
    %v664 = vpop.xlane.xlu0 %663
    %v665 = vrot.slane %v664, 4
    %v666 = vmin.f32 %v664, %v665
    %v667 = vrot.slane %v666, 2
    %v668 = vmin.f32 %v666, %v667
    %v669 = vrot.slane %v668, 1
    %v670 = vmin.f32 %v668, %v669
    %s671 = vtos %v670
    %v672 = vstv %s671
    %vm673 = vcmp.eq.f32.partialorder %v661, %v672
    %v674 = vsel %vm673, %v263, 128
    %v675 = vsel %vm269, %v674, 2147483647
    %v676 = vand.u32 %v675, 65535
    %v677 = vshra.s32 %v675, 16
    %v678 = vcvt.s32.f32 %v676
    %v679 = vcvt.s32.f32 %v677
    %680 = vmin.xlane.f32.xlu0 %v679
    %v681 = vpop.xlane.xlu0 %680
    %vm682 = vcmp.eq.f32.partialorder %v679, %v681
    %v683 = vsel %vm682, %v678, inf
    %684 = vmin.xlane.f32.xlu0 %v683
    %v685 = vpop.xlane.xlu0 %684
    %v686 = vcvt.f32.s32 %v685
    %v687 = vcvt.f32.s32 %v681
    %v688 = vshll.u32 %v687, 16
    %v689 = vadd.s32 %v688, %v686
    %v690 = vrot.slane %v689, 4
    %vm691 = vcmp.lt.s32.totalorder %v689, %v690
    %v692 = vsel %vm691, %v689, %v690
    %v693 = vrot.slane %v692, 2
    %vm694 = vcmp.lt.s32.totalorder %v692, %v693
    %v695 = vsel %vm694, %v692, %v693
    %v696 = vrot.slane %v695, 1
    %vm697 = vcmp.lt.s32.totalorder %v695, %v696
    %v698 = vsel %vm697, %v695, %v696
    %s699 = vtos %v698
    %700 = vst [vmem:[#allocation4 + $0x8] sm:$0x1] %v672
    %s701 = scalar_lea.vmem [#allocation2], %s699
    %v702 = vld [vmem:[%s701] sm:$0x1]
    %703 = vst [vmem:[#allocation3] sm:$0x1] %v702
    %v704 = vld [vmem:[#allocation3] sm:$0x1]
    %v705 = vstv %s699
    %vm706 = vcmp.eq.s32.totalorder %v263, %v705
    %vm707 = vcmp.eq.f32.partialorder %v661, 3e+38
    %vm708 = vmor %vm707, %vm706
    %v709 = vmin.f32 %v661, %v704
    %v710 = vsel %vm708, 3e+38, %v709
    %v711 = vsel %vm269, %v710, inf
    %712 = vmin.xlane.f32.xlu0 %v711
    %v713 = vpop.xlane.xlu0 %712
    %v714 = vrot.slane %v713, 4
    %v715 = vmin.f32 %v713, %v714
    %v716 = vrot.slane %v715, 2
    %v717 = vmin.f32 %v715, %v716
    %v718 = vrot.slane %v717, 1
    %v719 = vmin.f32 %v717, %v718
    %s720 = vtos %v719
    %v721 = vstv %s720
    %vm722 = vcmp.eq.f32.partialorder %v710, %v721
    %v723 = vsel %vm722, %v263, 128
    %v724 = vsel %vm269, %v723, 2147483647
    %v725 = vand.u32 %v724, 65535
    %v726 = vshra.s32 %v724, 16
    %v727 = vcvt.s32.f32 %v725
    %v728 = vcvt.s32.f32 %v726
    %729 = vmin.xlane.f32.xlu0 %v728
    %v730 = vpop.xlane.xlu0 %729
    %vm731 = vcmp.eq.f32.partialorder %v728, %v730
    %v732 = vsel %vm731, %v727, inf
    %733 = vmin.xlane.f32.xlu0 %v732
    %v734 = vpop.xlane.xlu0 %733
    %v735 = vcvt.f32.s32 %v734
    %v736 = vcvt.f32.s32 %v730
    %v737 = vshll.u32 %v736, 16
    %v738 = vadd.s32 %v737, %v735
    %v739 = vrot.slane %v738, 4
    %vm740 = vcmp.lt.s32.totalorder %v738, %v739
    %v741 = vsel %vm740, %v738, %v739
    %v742 = vrot.slane %v741, 2
    %vm743 = vcmp.lt.s32.totalorder %v741, %v742
    %v744 = vsel %vm743, %v741, %v742
    %v745 = vrot.slane %v744, 1
    %vm746 = vcmp.lt.s32.totalorder %v744, %v745
    %v747 = vsel %vm746, %v744, %v745
    %s748 = vtos %v747
    %749 = vst [vmem:[#allocation4 + $0x9] sm:$0x1] %v721
    %s750 = scalar_lea.vmem [#allocation2], %s748
    %v751 = vld [vmem:[%s750] sm:$0x1]
    %752 = vst [vmem:[#allocation3] sm:$0x1] %v751
    %v753 = vld [vmem:[#allocation3] sm:$0x1]
    %v754 = vstv %s748
    %vm755 = vcmp.eq.s32.totalorder %v263, %v754
    %vm756 = vcmp.eq.f32.partialorder %v710, 3e+38
    %vm757 = vmor %vm756, %vm755
    %v758 = vmin.f32 %v710, %v753
    %v759 = vsel %vm757, 3e+38, %v758
    %v760 = vsel %vm269, %v759, inf
    %761 = vmin.xlane.f32.xlu0 %v760
    %v762 = vpop.xlane.xlu0 %761
    %v763 = vrot.slane %v762, 4
    %v764 = vmin.f32 %v762, %v763
    %v765 = vrot.slane %v764, 2
    %v766 = vmin.f32 %v764, %v765
    %v767 = vrot.slane %v766, 1
    %v768 = vmin.f32 %v766, %v767
    %s769 = vtos %v768
    %v770 = vstv %s769
    %vm771 = vcmp.eq.f32.partialorder %v759, %v770
    %v772 = vsel %vm771, %v263, 128
    %v773 = vsel %vm269, %v772, 2147483647
    %v774 = vand.u32 %v773, 65535
    %v775 = vshra.s32 %v773, 16
    %v776 = vcvt.s32.f32 %v774
    %v777 = vcvt.s32.f32 %v775
    %778 = vmin.xlane.f32.xlu0 %v777
    %v779 = vpop.xlane.xlu0 %778
    %vm780 = vcmp.eq.f32.partialorder %v777, %v779
    %v781 = vsel %vm780, %v776, inf
    %782 = vmin.xlane.f32.xlu0 %v781
    %v783 = vpop.xlane.xlu0 %782
    %v784 = vcvt.f32.s32 %v783
    %v785 = vcvt.f32.s32 %v779
    %v786 = vshll.u32 %v785, 16
    %v787 = vadd.s32 %v786, %v784
    %v788 = vrot.slane %v787, 4
    %vm789 = vcmp.lt.s32.totalorder %v787, %v788
    %v790 = vsel %vm789, %v787, %v788
    %v791 = vrot.slane %v790, 2
    %vm792 = vcmp.lt.s32.totalorder %v790, %v791
    %v793 = vsel %vm792, %v790, %v791
    %v794 = vrot.slane %v793, 1
    %vm795 = vcmp.lt.s32.totalorder %v793, %v794
    %v796 = vsel %vm795, %v793, %v794
    %s797 = vtos %v796
    %798 = vst [vmem:[#allocation4 + $0xa] sm:$0x1] %v770
    %s799 = scalar_lea.vmem [#allocation2], %s797
    %v800 = vld [vmem:[%s799] sm:$0x1]
    %801 = vst [vmem:[#allocation3] sm:$0x1] %v800
    %v802 = vld [vmem:[#allocation3] sm:$0x1]
    %v803 = vstv %s797
    %vm804 = vcmp.eq.s32.totalorder %v263, %v803
    %vm805 = vcmp.eq.f32.partialorder %v759, 3e+38
    %vm806 = vmor %vm805, %vm804
    %v807 = vmin.f32 %v759, %v802
    %v808 = vsel %vm806, 3e+38, %v807
    %v809 = vsel %vm269, %v808, inf
    %810 = vmin.xlane.f32.xlu0 %v809
    %v811 = vpop.xlane.xlu0 %810
    %v812 = vrot.slane %v811, 4
    %v813 = vmin.f32 %v811, %v812
    %v814 = vrot.slane %v813, 2
    %v815 = vmin.f32 %v813, %v814
    %v816 = vrot.slane %v815, 1
    %v817 = vmin.f32 %v815, %v816
    %s818 = vtos %v817
    %v819 = vstv %s818
    %vm820 = vcmp.eq.f32.partialorder %v808, %v819
    %v821 = vsel %vm820, %v263, 128
    %v822 = vsel %vm269, %v821, 2147483647
    %v823 = vand.u32 %v822, 65535
    %v824 = vshra.s32 %v822, 16
    %v825 = vcvt.s32.f32 %v823
    %v826 = vcvt.s32.f32 %v824
    %827 = vmin.xlane.f32.xlu0 %v826
    %v828 = vpop.xlane.xlu0 %827
    %vm829 = vcmp.eq.f32.partialorder %v826, %v828
    %v830 = vsel %vm829, %v825, inf
    %831 = vmin.xlane.f32.xlu0 %v830
    %v832 = vpop.xlane.xlu0 %831
    %v833 = vcvt.f32.s32 %v832
    %v834 = vcvt.f32.s32 %v828
    %v835 = vshll.u32 %v834, 16
    %v836 = vadd.s32 %v835, %v833
    %v837 = vrot.slane %v836, 4
    %vm838 = vcmp.lt.s32.totalorder %v836, %v837
    %v839 = vsel %vm838, %v836, %v837
    %v840 = vrot.slane %v839, 2
    %vm841 = vcmp.lt.s32.totalorder %v839, %v840
    %v842 = vsel %vm841, %v839, %v840
    %v843 = vrot.slane %v842, 1
    %vm844 = vcmp.lt.s32.totalorder %v842, %v843
    %v845 = vsel %vm844, %v842, %v843
    %s846 = vtos %v845
    %847 = vst [vmem:[#allocation4 + $0xb] sm:$0x1] %v819
    %s848 = scalar_lea.vmem [#allocation2], %s846
    %v849 = vld [vmem:[%s848] sm:$0x1]
    %850 = vst [vmem:[#allocation3] sm:$0x1] %v849
    %v851 = vld [vmem:[#allocation3] sm:$0x1]
    %v852 = vstv %s846
    %vm853 = vcmp.eq.s32.totalorder %v263, %v852
    %vm854 = vcmp.eq.f32.partialorder %v808, 3e+38
    %vm855 = vmor %vm854, %vm853
    %v856 = vmin.f32 %v808, %v851
    %v857 = vsel %vm855, 3e+38, %v856
    %v858 = vsel %vm269, %v857, inf
    %859 = vmin.xlane.f32.xlu0 %v858
    %v860 = vpop.xlane.xlu0 %859
    %v861 = vrot.slane %v860, 4
    %v862 = vmin.f32 %v860, %v861
    %v863 = vrot.slane %v862, 2
    %v864 = vmin.f32 %v862, %v863
    %v865 = vrot.slane %v864, 1
    %v866 = vmin.f32 %v864, %v865
    %s867 = vtos %v866
    %v868 = vstv %s867
    %vm869 = vcmp.eq.f32.partialorder %v857, %v868
    %v870 = vsel %vm869, %v263, 128
    %v871 = vsel %vm269, %v870, 2147483647
    %v872 = vand.u32 %v871, 65535
    %v873 = vshra.s32 %v871, 16
    %v874 = vcvt.s32.f32 %v872
    %v875 = vcvt.s32.f32 %v873
    %876 = vmin.xlane.f32.xlu0 %v875
    %v877 = vpop.xlane.xlu0 %876
    %vm878 = vcmp.eq.f32.partialorder %v875, %v877
    %v879 = vsel %vm878, %v874, inf
    %880 = vmin.xlane.f32.xlu0 %v879
    %v881 = vpop.xlane.xlu0 %880
    %v882 = vcvt.f32.s32 %v881
    %v883 = vcvt.f32.s32 %v877
    %v884 = vshll.u32 %v883, 16
    %v885 = vadd.s32 %v884, %v882
    %v886 = vrot.slane %v885, 4
    %vm887 = vcmp.lt.s32.totalorder %v885, %v886
    %v888 = vsel %vm887, %v885, %v886
    %v889 = vrot.slane %v888, 2
    %vm890 = vcmp.lt.s32.totalorder %v888, %v889
    %v891 = vsel %vm890, %v888, %v889
    %v892 = vrot.slane %v891, 1
    %vm893 = vcmp.lt.s32.totalorder %v891, %v892
    %v894 = vsel %vm893, %v891, %v892
    %s895 = vtos %v894
    %896 = vst [vmem:[#allocation4 + $0xc] sm:$0x1] %v868
    %s897 = scalar_lea.vmem [#allocation2], %s895
    %v898 = vld [vmem:[%s897] sm:$0x1]
    %899 = vst [vmem:[#allocation3] sm:$0x1] %v898
    %v900 = vld [vmem:[#allocation3] sm:$0x1]
    %v901 = vstv %s895
    %vm902 = vcmp.eq.s32.totalorder %v263, %v901
    %vm903 = vcmp.eq.f32.partialorder %v857, 3e+38
    %vm904 = vmor %vm903, %vm902
    %v905 = vmin.f32 %v857, %v900
    %v906 = vsel %vm904, 3e+38, %v905
    %v907 = vsel %vm269, %v906, inf
    %908 = vmin.xlane.f32.xlu0 %v907
    %v909 = vpop.xlane.xlu0 %908
    %v910 = vrot.slane %v909, 4
    %v911 = vmin.f32 %v909, %v910
    %v912 = vrot.slane %v911, 2
    %v913 = vmin.f32 %v911, %v912
    %v914 = vrot.slane %v913, 1
    %v915 = vmin.f32 %v913, %v914
    %s916 = vtos %v915
    %v917 = vstv %s916
    %vm918 = vcmp.eq.f32.partialorder %v906, %v917
    %v919 = vsel %vm918, %v263, 128
    %v920 = vsel %vm269, %v919, 2147483647
    %v921 = vand.u32 %v920, 65535
    %v922 = vshra.s32 %v920, 16
    %v923 = vcvt.s32.f32 %v921
    %v924 = vcvt.s32.f32 %v922
    %925 = vmin.xlane.f32.xlu0 %v924
    %v926 = vpop.xlane.xlu0 %925
    %vm927 = vcmp.eq.f32.partialorder %v924, %v926
    %v928 = vsel %vm927, %v923, inf
    %929 = vmin.xlane.f32.xlu0 %v928
    %v930 = vpop.xlane.xlu0 %929
    %v931 = vcvt.f32.s32 %v930
    %v932 = vcvt.f32.s32 %v926
    %v933 = vshll.u32 %v932, 16
    %v934 = vadd.s32 %v933, %v931
    %v935 = vrot.slane %v934, 4
    %vm936 = vcmp.lt.s32.totalorder %v934, %v935
    %v937 = vsel %vm936, %v934, %v935
    %v938 = vrot.slane %v937, 2
    %vm939 = vcmp.lt.s32.totalorder %v937, %v938
    %v940 = vsel %vm939, %v937, %v938
    %v941 = vrot.slane %v940, 1
    %vm942 = vcmp.lt.s32.totalorder %v940, %v941
    %v943 = vsel %vm942, %v940, %v941
    %s944 = vtos %v943
    %945 = vst [vmem:[#allocation4 + $0xd] sm:$0x1] %v917
    %s946 = scalar_lea.vmem [#allocation2], %s944
    %v947 = vld [vmem:[%s946] sm:$0x1]
    %948 = vst [vmem:[#allocation3] sm:$0x1] %v947
    %v949 = vld [vmem:[#allocation3] sm:$0x1]
    %v950 = vstv %s944
    %vm951 = vcmp.eq.s32.totalorder %v263, %v950
    %vm952 = vcmp.eq.f32.partialorder %v906, 3e+38
    %vm953 = vmor %vm952, %vm951
    %v954 = vmin.f32 %v906, %v949
    %v955 = vsel %vm953, 3e+38, %v954
    %v956 = vsel %vm269, %v955, inf
    %957 = vmin.xlane.f32.xlu0 %v956
    %v958 = vpop.xlane.xlu0 %957
    %v959 = vrot.slane %v958, 4
    %v960 = vmin.f32 %v958, %v959
    %v961 = vrot.slane %v960, 2
    %v962 = vmin.f32 %v960, %v961
    %v963 = vrot.slane %v962, 1
    %v964 = vmin.f32 %v962, %v963
    %s965 = vtos %v964
    %v966 = vstv %s965
    %vm967 = vcmp.eq.f32.partialorder %v955, %v966
    %v968 = vsel %vm967, %v263, 128
    %v969 = vsel %vm269, %v968, 2147483647
    %v970 = vand.u32 %v969, 65535
    %v971 = vshra.s32 %v969, 16
    %v972 = vcvt.s32.f32 %v970
    %v973 = vcvt.s32.f32 %v971
    %974 = vmin.xlane.f32.xlu0 %v973
    %v975 = vpop.xlane.xlu0 %974
    %vm976 = vcmp.eq.f32.partialorder %v973, %v975
    %v977 = vsel %vm976, %v972, inf
    %978 = vmin.xlane.f32.xlu0 %v977
    %v979 = vpop.xlane.xlu0 %978
    %v980 = vcvt.f32.s32 %v979
    %v981 = vcvt.f32.s32 %v975
    %v982 = vshll.u32 %v981, 16
    %v983 = vadd.s32 %v982, %v980
    %v984 = vrot.slane %v983, 4
    %vm985 = vcmp.lt.s32.totalorder %v983, %v984
    %v986 = vsel %vm985, %v983, %v984
    %v987 = vrot.slane %v986, 2
    %vm988 = vcmp.lt.s32.totalorder %v986, %v987
    %v989 = vsel %vm988, %v986, %v987
    %v990 = vrot.slane %v989, 1
    %vm991 = vcmp.lt.s32.totalorder %v989, %v990
    %v992 = vsel %vm991, %v989, %v990
    %s993 = vtos %v992
    %994 = vst [vmem:[#allocation4 + $0xe] sm:$0x1] %v966
    %s995 = scalar_lea.vmem [#allocation2], %s993
    %v996 = vld [vmem:[%s995] sm:$0x1]
    %997 = vst [vmem:[#allocation3] sm:$0x1] %v996
    // Predicated region
    $region10: #{tpu_custom_call.1} parent=1 // pred_check
      _
    $region11: #{tpu_custom_call.1} parent=1 // pred_check_branch
      %999 = sbr.rel (0) target = $region13
    $region12: #{tpu_custom_call.1} parent=1 // pred_region
      %1001 = vsyncadd [#allocation5], 0
      %s1002 = sshll.u32 [#allocation4], 4
      %s1003 = int_to_ptr.vmem [resolvable:$true] %s1002
      %s1004 = sshll.u32 %s2, 4
      %s1005 = int_to_ptr.hbm [resolvable:$true] %s1004
      %1010 = dma.vmem_to_hbm [thread:$0]  %s1003, 256, %s1005, [#allocation5], 128, 128, 8
    $region13: #{tpu_custom_call.1} parent=1 // pred_fallthru
      _
    // Predicated region
    $region14: #{tpu_custom_call.1} parent=1 // pred_check
      _
    $region15: #{tpu_custom_call.1} parent=1 // pred_check_branch
      %1012 = sbr.rel (0) target = $region17
    $region16: #{tpu_custom_call.1} parent=1 // pred_region
      %1014 = dma.done [#allocation5], 256
    $region17: #{tpu_custom_call.1} parent=1 // pred_fallthru
      _
    %1015 = vsyncpa [#allocation5], 1

</llo_original>
